<compile_context>
chip_gen: v7x
topology: tpu7x:2x2x1
jax: 0.10.0
libtpu: 0.0.40
codegen_flags: <defaults>
</compile_context>

<pallas_src>
import functools

import jax
import jax.numpy as jnp
from jax.experimental import pallas as pl
from jax.experimental.pallas import tpu as pltpu

LANES = 128
LN_EPS = 1e-5


def _ceil8(x):
    return ((x + 7) // 8) * 8


# ----------------------------------------------------------------------------
# Fused Pallas kernel: whole forward pass, one call, 5 input DMAs, 1 output DMA
# ----------------------------------------------------------------------------
def _fused_forward_kernel(ids_ref, m_ref, g_ref, w_ref, b_ref, o_ref, *,
                          E, N, F0, C, n_enc, n_dec, num_mask, m8,
                          w_layout, b_layout):
    n_pad = _ceil8(N)
    e_pad = _ceil8(E)

    # --- carve the packed slabs with static slices ------------------------
    a_mean = g_ref[0:N, 0:E]                 # (N, E)  mean edge->node aggregation
    g_mat = g_ref[n_pad:n_pad + E, 0:N]      # (E, N)  endpoint gather (h[src]+h[dst])

    def w(i):
        off, r, c = w_layout[i]
        return w_ref[off:off + r, 0:c]

    def b(i):
        row, c = b_layout[i]
        return b_ref[row:row + 1, 0:c]

    # --- encoding_mask_noise: out_x[mask]=0 ; out_x[mask]+=enc_mask_token --
    m_in = m_ref[...]                        # (E, F0) raw edge features
    tok = b(2 * n_enc + 3)                   # (1, F0) enc_mask_token
    e_iota = jax.lax.broadcasted_iota(jnp.int32, (E, 1), 0)
    flag = jnp.zeros((E, 1), jnp.float32)
    for j in range(num_mask):                # mask ids read as scalars from SMEM
        flag = jnp.maximum(flag, (e_iota == ids_ref[j]).astype(jnp.float32))
    x = jnp.where(flag > 0.0, tok, m_in)

    # --- SAGE-style layer --------------------------------------------------
    def sage(x, wn, bn, we, be):
        agg = jnp.dot(a_mean, x, preferred_element_type=jnp.float32)        # (N, Fin)
        h = jnp.maximum(jnp.dot(agg, wn, preferred_element_type=jnp.float32) + bn, 0.0)
        neigh = jnp.dot(g_mat, h, preferred_element_type=jnp.float32)       # (E, Fout)
        me = jnp.dot(x, we, preferred_element_type=jnp.float32) + be + neigh
        return jnp.maximum(me, 0.0), h

    # encoder_ (dropout p=0 -> identity)
    h = None
    for l in range(n_enc):
        x, h = sage(x, w(2 * l), b(2 * l), w(2 * l + 1), b(2 * l + 1))
    m1 = x

    # node_pred: Linear(hidden, node_classes) -> LayerNorm(node_classes)
    y = jnp.dot(h, w(2 * n_enc), preferred_element_type=jnp.float32) + b(2 * n_enc)
    mu = jnp.mean(y, axis=-1, keepdims=True)
    var = jnp.mean((y - mu) ** 2, axis=-1, keepdims=True)
    nsc = (y - mu) * jax.lax.rsqrt(var + LN_EPS) * b(2 * n_enc + 1) + b(2 * n_enc + 2)

    # encoder_to_decoder (no bias) + decoder_
    x = jnp.dot(m1, w(2 * n_enc + 1), preferred_element_type=jnp.float32)
    for l in range(n_dec):
        bw = 2 * n_enc + 2 + 2 * l
        bb = 2 * n_enc + 4 + 2 * l
        x, _ = sage(x, w(bw), b(bb), w(bw + 1), b(bb + 1))
    recon = x                                 # (E, F0)

    # --- in-kernel masked-row gather via one-hot matmul --------------------
    if num_mask > 0:
        row_iota = jax.lax.broadcasted_iota(jnp.int32, (m8, E), 0)
        col_iota = jax.lax.broadcasted_iota(jnp.int32, (m8, E), 1)
        sel = jnp.zeros((m8, E), jnp.float32)
        for j in range(num_mask):
            hit = jnp.logical_and(row_iota == j, col_iota == ids_ref[j])
            sel = sel + jnp.where(hit, 1.0, 0.0)
        x_pred = jnp.dot(sel, recon, preferred_element_type=jnp.float32)    # (m8, F0)
        x_true = jnp.dot(sel, m_in, preferred_element_type=jnp.float32)     # (m8, F0)

    # --- single lane-dense output slab -------------------------------------
    o_ref[...] = jnp.zeros_like(o_ref)
    o_ref[0:E, 0:F0] = recon
    if num_mask > 0:
        o_ref[e_pad:e_pad + m8, 0:F0] = x_pred
        o_ref[e_pad + m8:e_pad + 2 * m8, 0:F0] = x_true
    o_ref[e_pad + 2 * m8:e_pad + 2 * m8 + N, 0:C] = nsc


def fused_forward(mask_ids, m, g_slab, w_slab, b_slab, *, meta, num_mask, m8):
    N, C, n_enc, n_dec, w_layout, b_layout = meta
    E, F0 = m.shape
    rows = _ceil8(E) + 2 * m8 + _ceil8(N)
    kernel = functools.partial(
        _fused_forward_kernel, E=E, N=N, F0=F0, C=C, n_enc=n_enc, n_dec=n_dec,
        num_mask=num_mask, m8=m8, w_layout=w_layout, b_layout=b_layout)
    vmem = lambda: pl.BlockSpec(memory_space=pltpu.MemorySpace.VMEM)
    return pl.pallas_call(
        kernel,
        out_shape=jax.ShapeDtypeStruct((rows, LANES), jnp.float32),
        in_specs=[pl.BlockSpec(memory_space=pltpu.MemorySpace.SMEM),  # mask ids
                  vmem(), vmem(), vmem(), vmem()],
        out_specs=vmem(),
    )(mask_ids, m, g_slab, w_slab, b_slab)


# ----------------------------------------------------------------------------
# Parameter init + one-time slab packing (outside the per-step path)
# ----------------------------------------------------------------------------
def init_params(key, dimensions_layers, node_classes):
    def lin_init(k, fin, fout, scale=0.1):
        return scale * jax.random.normal(k, (fin, fout), jnp.float32)

    keys = iter(jax.random.split(key, 64))
    encoder, decoder = [], []
    for i in range(len(dimensions_layers) - 1):
        fin, fout = dimensions_layers[i], dimensions_layers[i + 1]
        encoder.append(dict(
            w_node=lin_init(next(keys), fin, fout),
            b_node=0.01 * jax.random.normal(next(keys), (1, fout), jnp.float32),
            w_edge=lin_init(next(keys), fin, fout),
            b_edge=0.01 * jax.random.normal(next(keys), (1, fout), jnp.float32)))
        decoder.insert(0, dict(
            w_node=lin_init(next(keys), fout, fin),
            b_node=0.01 * jax.random.normal(next(keys), (1, fin), jnp.float32),
            w_edge=lin_init(next(keys), fout, fin),
            b_edge=0.01 * jax.random.normal(next(keys), (1, fin), jnp.float32)))
    in_dim = dimensions_layers[0]
    hidden_dim = dimensions_layers[-1]
    return dict(
        encoder=encoder,
        decoder=decoder,
        enc_mask_token=jnp.zeros((1, in_dim), jnp.float32),   # nn.Parameter(torch.zeros)
        e2d_w=lin_init(next(keys), hidden_dim, hidden_dim),   # Linear(hidden, hidden, bias=False)
        node_pred_w=lin_init(next(keys), hidden_dim, node_classes),
        node_pred_b=0.01 * jax.random.normal(next(keys), (1, node_classes), jnp.float32),
        ln_gamma=jnp.ones((node_classes,), jnp.float32),
        ln_beta=jnp.zeros((node_classes,), jnp.float32),
    )


def pack_params(params):
    """Pack all weights into one (R,128) slab and all 1-row vectors into another."""
    enc, dec = params['encoder'], params['decoder']
    C = params['node_pred_w'].shape[1]
    n_enc, n_dec = len(enc), len(dec)

    weights = []
    for layer in enc:
        weights += [layer['w_node'], layer['w_edge']]
    weights += [params['node_pred_w'], params['e2d_w']]
    for layer in dec:
        weights += [layer['w_node'], layer['w_edge']]

    w_layout, blocks, off = [], [], 0
    for wm in weights:
        r, c = wm.shape
        rp = _ceil8(r)
        w_layout.append((off, r, c))
        blocks.append(jnp.zeros((rp, LANES), jnp.float32).at[:r, :c].set(wm))
        off += rp
    w_slab = jnp.concatenate(blocks, axis=0)

    vecs = []
    for layer in enc:
        vecs += [layer['b_node'], layer['b_edge']]
    vecs += [params['node_pred_b'], params['ln_gamma'].reshape(1, -1),
             params['ln_beta'].reshape(1, -1), params['enc_mask_token']]
    for layer in dec:
        vecs += [layer['b_node'], layer['b_edge']]

    b_layout, rows = [], []
    for i, v in enumerate(vecs):
        v = v.reshape(1, -1)
        c = v.shape[1]
        b_layout.append((i, c))
        rows.append(jnp.zeros((1, LANES), jnp.float32).at[:, :c].set(v))
    n_rows = _ceil8(len(rows))
    if n_rows > len(rows):
        rows.append(jnp.zeros((n_rows - len(rows), LANES), jnp.float32))
    b_slab = jnp.concatenate(rows, axis=0)

    meta = (C, n_enc, n_dec, tuple(w_layout), tuple(b_layout))
    return w_slab, b_slab, meta


def pack_graph(src, dst, num_nodes, num_edges):
    # TODO(synk): self-loop edges are counted twice in incidence/degree; confirm
    # against the reference scatter-mean semantics if self-loops can occur.
    src_oh = jax.nn.one_hot(src, num_nodes, dtype=jnp.float32)    # (E, N)
    dst_oh = jax.nn.one_hot(dst, num_nodes, dtype=jnp.float32)    # (E, N)
    inc = src_oh + dst_oh                                         # (E, N)
    deg = jnp.maximum(jnp.sum(inc, axis=0), 1.0)                  # (N,)
    a_mean = (inc / deg[None, :]).T                               # (N, E)
    g_mat = inc                                                   # (E, N)
    n_pad, e_pad = _ceil8(num_nodes), _ceil8(num_edges)
    slab = jnp.zeros((n_pad + e_pad, LANES), jnp.float32)
    slab = slab.at[:num_nodes, :num_edges].set(a_mean)
    slab = slab.at[n_pad:n_pad + num_edges, :num_nodes].set(g_mat)
    return slab


# ----------------------------------------------------------------------------
# Per-step forward (single jit dispatch: randperm + one fused Pallas kernel)
# ----------------------------------------------------------------------------
@functools.partial(jax.jit, static_argnames=("num_nodes", "meta", "mask_rate"))
def forward(w_slab, b_slab, g_slab, m, mask_key, *, num_nodes, meta, mask_rate):
    C, n_enc, n_dec, w_layout, b_layout = meta
    E, F0 = m.shape
    N = num_nodes
    num_mask = int(mask_rate * E)
    m8 = _ceil8(max(num_mask, 1))

    perm = jax.random.permutation(mask_key, E)        # torch.randperm analogue
    if num_mask > 0:
        mask_ids = perm[:num_mask].astype(jnp.int32)
    else:
        mask_ids = jnp.full((1,), -1, jnp.int32)

    out = fused_forward(mask_ids, m, g_slab, w_slab, b_slab,
                        meta=(N, C, n_enc, n_dec, w_layout, b_layout),
                        num_mask=num_mask, m8=m8)

    e_pad = _ceil8(E)
    r_pred, r_true, r_nsc = e_pad, e_pad + m8, e_pad + 2 * m8
    n_scores = out[r_nsc:r_nsc + N, 0:C]
    if mask_rate == 0.0:
        x_pred = out[0:E, 0:F0]
        x_true = m
    else:
        x_pred = out[r_pred:r_pred + num_mask, 0:F0]
        x_true = out[r_true:r_true + num_mask, 0:F0]
    return x_pred, x_true, n_scores


# ----------------------------------------------------------------------------
# Main
# ----------------------------------------------------------------------------
if __name__ == "__main__":
    key = jax.random.PRNGKey(0)
    k_param, k_feat, k_src, k_dst, k_mask = jax.random.split(key, 5)

    dimensions_layers = [16, 32, 8]   # in_dim=16, hidden=8
    node_classes = 4
    mask_rate = 0.2
    num_nodes = 8
    num_edges = 20

    params = init_params(k_param, dimensions_layers, node_classes)
    w_slab, b_slab, meta = pack_params(params)          # once (not per step)

    src = jax.random.randint(k_src, (num_edges,), 0, num_nodes)
    dst = jax.random.randint(k_dst, (num_edges,), 0, num_nodes)
    m = jax.random.normal(k_feat, (num_edges, dimensions_layers[0]), jnp.float32)
    g_slab = pack_graph(src, dst, num_nodes, num_edges)  # once per graph

    x_pred, x_true, n_scores = forward(
        w_slab, b_slab, g_slab, m, k_mask,
        num_nodes=num_nodes, meta=meta, mask_rate=mask_rate)
    jax.block_until_ready((x_pred, x_true, n_scores))

    num_mask = int(mask_rate * num_edges)
    assert x_pred.shape == (num_mask, dimensions_layers[0])
    assert x_true.shape == x_pred.shape
    assert n_scores.shape == (num_nodes, node_classes)
    assert bool(jnp.all(jnp.isfinite(x_pred)))
    assert bool(jnp.all(jnp.isfinite(x_true)))
    assert bool(jnp.all(jnp.isfinite(n_scores)))
    print("KERNEL_OK")
</pallas_src>

<mosaic_0001>
module attributes {stable_mosaic.version = 11 : i64} {
  func.func @_fused_forward_kernel(%arg0: memref<4xi32, #tpu.memory_space<smem>>, %arg1: memref<20x16xf32, #tpu.memory_space<vmem>>, %arg2: memref<32x128xf32, #tpu.memory_space<vmem>>, %arg3: memref<192x128xf32, #tpu.memory_space<vmem>>, %arg4: memref<16x128xf32, #tpu.memory_space<vmem>>, %arg5: memref<48x128xf32, #tpu.memory_space<vmem>>) attributes {dimension_semantics = [], scalar_prefetch = 0 : i64, scratch_operands = 0 : i64, tpu.core_type = #tpu.core_type<tc>} {
    %c0 = arith.constant 0 : index
    %c0_0 = arith.constant 0 : index
    %0 = vector.load %arg2[%c0, %c0_0] : memref<32x128xf32, #tpu.memory_space<vmem>>, vector<8x20xf32>
    %c8 = arith.constant 8 : index
    %c0_1 = arith.constant 0 : index
    %1 = vector.load %arg2[%c8, %c0_1] : memref<32x128xf32, #tpu.memory_space<vmem>>, vector<20x8xf32>
    %c0_2 = arith.constant 0 : index
    %c0_3 = arith.constant 0 : index
    %2 = vector.load %arg1[%c0_2, %c0_3] : memref<20x16xf32, #tpu.memory_space<vmem>>, vector<20x16xf32>
    %c7 = arith.constant 7 : index
    %c0_4 = arith.constant 0 : index
    %3 = vector.load %arg4[%c7, %c0_4] : memref<16x128xf32, #tpu.memory_space<vmem>>, vector<1x16xf32>
    %4 = tpu.iota {dimensions = array<i32: 0>} : vector<20x1xi32>
    %cst = arith.constant 0.000000e+00 : f32
    %5 = vector.broadcast %cst : f32 to vector<20x1xf32>
    %c0_5 = arith.constant 0 : index
    %6 = memref.load %arg0[%c0_5] : memref<4xi32, #tpu.memory_space<smem>>
    %7 = vector.broadcast %6 : i32 to vector<20x1xi32>
    %8 = arith.cmpi eq, %4, %7 : vector<20x1xi32>
    %9 = arith.extui %8 : vector<20x1xi1> to vector<20x1xi32>
    %10 = arith.sitofp %9 : vector<20x1xi32> to vector<20x1xf32>
    %11 = arith.maximumf %5, %10 : vector<20x1xf32>
    %c1 = arith.constant 1 : index
    %12 = memref.load %arg0[%c1] : memref<4xi32, #tpu.memory_space<smem>>
    %13 = vector.broadcast %12 : i32 to vector<20x1xi32>
    %14 = arith.cmpi eq, %4, %13 : vector<20x1xi32>
    %15 = arith.extui %14 : vector<20x1xi1> to vector<20x1xi32>
    %16 = arith.sitofp %15 : vector<20x1xi32> to vector<20x1xf32>
    %17 = arith.maximumf %11, %16 : vector<20x1xf32>
    %c2 = arith.constant 2 : index
    %18 = memref.load %arg0[%c2] : memref<4xi32, #tpu.memory_space<smem>>
    %19 = vector.broadcast %18 : i32 to vector<20x1xi32>
    %20 = arith.cmpi eq, %4, %19 : vector<20x1xi32>
    %21 = arith.extui %20 : vector<20x1xi1> to vector<20x1xi32>
    %22 = arith.sitofp %21 : vector<20x1xi32> to vector<20x1xf32>
    %23 = arith.maximumf %17, %22 : vector<20x1xf32>
    %c3 = arith.constant 3 : index
    %24 = memref.load %arg0[%c3] : memref<4xi32, #tpu.memory_space<smem>>
    %25 = vector.broadcast %24 : i32 to vector<20x1xi32>
    %26 = arith.cmpi eq, %4, %25 : vector<20x1xi32>
    %27 = arith.extui %26 : vector<20x1xi1> to vector<20x1xi32>
    %28 = arith.sitofp %27 : vector<20x1xi32> to vector<20x1xf32>
    %29 = arith.maximumf %23, %28 : vector<20x1xf32>
    %cst_6 = arith.constant 0.000000e+00 : f32
    %30 = vector.broadcast %cst_6 : f32 to vector<20x1xf32>
    %31 = arith.cmpf ogt, %29, %30 : vector<20x1xf32>
    %32 = vector.shape_cast %31 : vector<20x1xi1> to vector<20x1xi1>
    %33 = vector.broadcast %32 : vector<20x1xi1> to vector<20x16xi1>
    %34 = vector.shape_cast %3 : vector<1x16xf32> to vector<1x16xf32>
    %35 = vector.broadcast %34 : vector<1x16xf32> to vector<20x16xf32>
    %36 = arith.select %33, %35, %2 : vector<20x16xi1>, vector<20x16xf32>
    %c0_7 = arith.constant 0 : index
    %c0_8 = arith.constant 0 : index
    %37 = vector.load %arg3[%c0_7, %c0_8] : memref<192x128xf32, #tpu.memory_space<vmem>>, vector<16x32xf32>
    %c0_9 = arith.constant 0 : index
    %c0_10 = arith.constant 0 : index
    %38 = vector.load %arg4[%c0_9, %c0_10] : memref<16x128xf32, #tpu.memory_space<vmem>>, vector<1x32xf32>
    %c16 = arith.constant 16 : index
    %c0_11 = arith.constant 0 : index
    %39 = vector.load %arg3[%c16, %c0_11] : memref<192x128xf32, #tpu.memory_space<vmem>>, vector<16x32xf32>
    %c1_12 = arith.constant 1 : index
    %c0_13 = arith.constant 0 : index
    %40 = vector.load %arg4[%c1_12, %c0_13] : memref<16x128xf32, #tpu.memory_space<vmem>>, vector<1x32xf32>
    %cst_14 = arith.constant dense<0.000000e+00> : vector<8x16xf32>
    %41 = tpu.matmul %0, %36, %cst_14 {dimension_numbers = #tpu.dot_dimension_numbers<[1], [0], [0], [1], [0, 0, 1, 1], [], []>} : vector<8x20xf32>, vector<20x16xf32>, vector<8x16xf32> -> vector<8x16xf32>
    %cst_15 = arith.constant dense<0.000000e+00> : vector<8x32xf32>
    %42 = tpu.matmul %41, %37, %cst_15 {dimension_numbers = #tpu.dot_dimension_numbers<[1], [0], [0], [1], [0, 0, 1, 1], [], []>} : vector<8x16xf32>, vector<16x32xf32>, vector<8x32xf32> -> vector<8x32xf32>
    %43 = vector.broadcast %38 : vector<1x32xf32> to vector<8x32xf32>
    %44 = arith.addf %42, %43 : vector<8x32xf32>
    %cst_16 = arith.constant 0.000000e+00 : f32
    %45 = vector.broadcast %cst_16 : f32 to vector<8x32xf32>
    %46 = arith.maximumf %44, %45 : vector<8x32xf32>
    %cst_17 = arith.constant dense<0.000000e+00> : vector<20x32xf32>
    %47 = tpu.matmul %1, %46, %cst_17 {dimension_numbers = #tpu.dot_dimension_numbers<[1], [0], [0], [1], [0, 0, 1, 1], [], []>} : vector<20x8xf32>, vector<8x32xf32>, vector<20x32xf32> -> vector<20x32xf32>
    %cst_18 = arith.constant dense<0.000000e+00> : vector<20x32xf32>
    %48 = tpu.matmul %36, %39, %cst_18 {dimension_numbers = #tpu.dot_dimension_numbers<[1], [0], [0], [1], [0, 0, 1, 1], [], []>} : vector<20x16xf32>, vector<16x32xf32>, vector<20x32xf32> -> vector<20x32xf32>
    %49 = vector.broadcast %40 : vector<1x32xf32> to vector<20x32xf32>
    %50 = arith.addf %48, %49 : vector<20x32xf32>
    %51 = arith.addf %50, %47 : vector<20x32xf32>
    %cst_19 = arith.constant 0.000000e+00 : f32
    %52 = vector.broadcast %cst_19 : f32 to vector<20x32xf32>
    %53 = arith.maximumf %51, %52 : vector<20x32xf32>
    %c32 = arith.constant 32 : index
    %c0_20 = arith.constant 0 : index
    %54 = vector.load %arg3[%c32, %c0_20] : memref<192x128xf32, #tpu.memory_space<vmem>>, vector<32x8xf32>
    %c2_21 = arith.constant 2 : index
    %c0_22 = arith.constant 0 : index
    %55 = vector.load %arg4[%c2_21, %c0_22] : memref<16x128xf32, #tpu.memory_space<vmem>>, vector<1x8xf32>
    %c64 = arith.constant 64 : index
    %c0_23 = arith.constant 0 : index
    %56 = vector.load %arg3[%c64, %c0_23] : memref<192x128xf32, #tpu.memory_space<vmem>>, vector<32x8xf32>
    %c3_24 = arith.constant 3 : index
    %c0_25 = arith.constant 0 : index
    %57 = vector.load %arg4[%c3_24, %c0_25] : memref<16x128xf32, #tpu.memory_space<vmem>>, vector<1x8xf32>
    %cst_26 = arith.constant dense<0.000000e+00> : vector<8x32xf32>
    %58 = tpu.matmul %0, %53, %cst_26 {dimension_numbers = #tpu.dot_dimension_numbers<[1], [0], [0], [1], [0, 0, 1, 1], [], []>} : vector<8x20xf32>, vector<20x32xf32>, vector<8x32xf32> -> vector<8x32xf32>
    %cst_27 = arith.constant dense<0.000000e+00> : vector<8x8xf32>
    %59 = tpu.matmul %58, %54, %cst_27 {dimension_numbers = #tpu.dot_dimension_numbers<[1], [0], [0], [1], [0, 0, 1, 1], [], []>} : vector<8x32xf32>, vector<32x8xf32>, vector<8x8xf32> -> vector<8x8xf32>
    %60 = vector.broadcast %55 : vector<1x8xf32> to vector<8x8xf32>
    %61 = arith.addf %59, %60 : vector<8x8xf32>
    %cst_28 = arith.constant 0.000000e+00 : f32
    %62 = vector.broadcast %cst_28 : f32 to vector<8x8xf32>
    %63 = arith.maximumf %61, %62 : vector<8x8xf32>
    %cst_29 = arith.constant dense<0.000000e+00> : vector<20x8xf32>
    %64 = tpu.matmul %1, %63, %cst_29 {dimension_numbers = #tpu.dot_dimension_numbers<[1], [0], [0], [1], [0, 0, 1, 1], [], []>} : vector<20x8xf32>, vector<8x8xf32>, vector<20x8xf32> -> vector<20x8xf32>
    %cst_30 = arith.constant dense<0.000000e+00> : vector<20x8xf32>
    %65 = tpu.matmul %53, %56, %cst_30 {dimension_numbers = #tpu.dot_dimension_numbers<[1], [0], [0], [1], [0, 0, 1, 1], [], []>} : vector<20x32xf32>, vector<32x8xf32>, vector<20x8xf32> -> vector<20x8xf32>
    %66 = vector.broadcast %57 : vector<1x8xf32> to vector<20x8xf32>
    %67 = arith.addf %65, %66 : vector<20x8xf32>
    %68 = arith.addf %67, %64 : vector<20x8xf32>
    %cst_31 = arith.constant 0.000000e+00 : f32
    %69 = vector.broadcast %cst_31 : f32 to vector<20x8xf32>
    %70 = arith.maximumf %68, %69 : vector<20x8xf32>
    %c96 = arith.constant 96 : index
    %c0_32 = arith.constant 0 : index
    %71 = vector.load %arg3[%c96, %c0_32] : memref<192x128xf32, #tpu.memory_space<vmem>>, vector<8x4xf32>
    %cst_33 = arith.constant dense<0.000000e+00> : vector<8x4xf32>
    %72 = tpu.matmul %63, %71, %cst_33 {dimension_numbers = #tpu.dot_dimension_numbers<[1], [0], [0], [1], [0, 0, 1, 1], [], []>} : vector<8x8xf32>, vector<8x4xf32>, vector<8x4xf32> -> vector<8x4xf32>
    %c4 = arith.constant 4 : index
    %c0_34 = arith.constant 0 : index
    %73 = vector.load %arg4[%c4, %c0_34] : memref<16x128xf32, #tpu.memory_space<vmem>>, vector<1x4xf32>
    %74 = vector.broadcast %73 : vector<1x4xf32> to vector<8x4xf32>
    %75 = arith.addf %72, %74 : vector<8x4xf32>
    %cst_35 = arith.constant dense<0.000000e+00> : vector<8xf32>
    %76 = vector.multi_reduction <add>, %75, %cst_35 [1] : vector<8x4xf32> to vector<8xf32>
    %77 = vector.shape_cast %76 : vector<8xf32> to vector<8x1xf32>
    %cst_36 = arith.constant 4.000000e+00 : f32
    %78 = vector.broadcast %cst_36 : f32 to vector<8x1xf32>
    %79 = arith.divf %77, %78 : vector<8x1xf32>
    %80 = vector.broadcast %79 : vector<8x1xf32> to vector<8x4xf32>
    %81 = arith.subf %75, %80 : vector<8x4xf32>
    %82 = arith.mulf %81, %81 : vector<8x4xf32>
    %cst_37 = arith.constant dense<0.000000e+00> : vector<8xf32>
    %83 = vector.multi_reduction <add>, %82, %cst_37 [1] : vector<8x4xf32> to vector<8xf32>
    %84 = vector.shape_cast %83 : vector<8xf32> to vector<8x1xf32>
    %cst_38 = arith.constant 4.000000e+00 : f32
    %85 = vector.broadcast %cst_38 : f32 to vector<8x1xf32>
    %86 = arith.divf %84, %85 : vector<8x1xf32>
    %87 = vector.broadcast %79 : vector<8x1xf32> to vector<8x4xf32>
    %88 = arith.subf %75, %87 : vector<8x4xf32>
    %cst_39 = arith.constant 9.99999974E-6 : f32
    %89 = vector.broadcast %cst_39 : f32 to vector<8x1xf32>
    %90 = arith.addf %86, %89 : vector<8x1xf32>
    %91 = math.rsqrt %90 : vector<8x1xf32>
    %92 = vector.broadcast %91 : vector<8x1xf32> to vector<8x4xf32>
    %93 = arith.mulf %88, %92 : vector<8x4xf32>
    %c5 = arith.constant 5 : index
    %c0_40 = arith.constant 0 : index
    %94 = vector.load %arg4[%c5, %c0_40] : memref<16x128xf32, #tpu.memory_space<vmem>>, vector<1x4xf32>
    %95 = vector.broadcast %94 : vector<1x4xf32> to vector<8x4xf32>
    %96 = arith.mulf %93, %95 : vector<8x4xf32>
    %c6 = arith.constant 6 : index
    %c0_41 = arith.constant 0 : index
    %97 = vector.load %arg4[%c6, %c0_41] : memref<16x128xf32, #tpu.memory_space<vmem>>, vector<1x4xf32>
    %98 = vector.broadcast %97 : vector<1x4xf32> to vector<8x4xf32>
    %99 = arith.addf %96, %98 : vector<8x4xf32>
    %c104 = arith.constant 104 : index
    %c0_42 = arith.constant 0 : index
    %100 = vector.load %arg3[%c104, %c0_42] : memref<192x128xf32, #tpu.memory_space<vmem>>, vector<8x8xf32>
    %cst_43 = arith.constant dense<0.000000e+00> : vector<20x8xf32>
    %101 = tpu.matmul %70, %100, %cst_43 {dimension_numbers = #tpu.dot_dimension_numbers<[1], [0], [0], [1], [0, 0, 1, 1], [], []>} : vector<20x8xf32>, vector<8x8xf32>, vector<20x8xf32> -> vector<20x8xf32>
    %c112 = arith.constant 112 : index
    %c0_44 = arith.constant 0 : index
    %102 = vector.load %arg3[%c112, %c0_44] : memref<192x128xf32, #tpu.memory_space<vmem>>, vector<8x32xf32>
    %c8_45 = arith.constant 8 : index
    %c0_46 = arith.constant 0 : index
    %103 = vector.load %arg4[%c8_45, %c0_46] : memref<16x128xf32, #tpu.memory_space<vmem>>, vector<1x32xf32>
    %c120 = arith.constant 120 : index
    %c0_47 = arith.constant 0 : index
    %104 = vector.load %arg3[%c120, %c0_47] : memref<192x128xf32, #tpu.memory_space<vmem>>, vector<8x32xf32>
    %c9 = arith.constant 9 : index
    %c0_48 = arith.constant 0 : index
    %105 = vector.load %arg4[%c9, %c0_48] : memref<16x128xf32, #tpu.memory_space<vmem>>, vector<1x32xf32>
    %cst_49 = arith.constant dense<0.000000e+00> : vector<8x8xf32>
    %106 = tpu.matmul %0, %101, %cst_49 {dimension_numbers = #tpu.dot_dimension_numbers<[1], [0], [0], [1], [0, 0, 1, 1], [], []>} : vector<8x20xf32>, vector<20x8xf32>, vector<8x8xf32> -> vector<8x8xf32>
    %cst_50 = arith.constant dense<0.000000e+00> : vector<8x32xf32>
    %107 = tpu.matmul %106, %102, %cst_50 {dimension_numbers = #tpu.dot_dimension_numbers<[1], [0], [0], [1], [0, 0, 1, 1], [], []>} : vector<8x8xf32>, vector<8x32xf32>, vector<8x32xf32> -> vector<8x32xf32>
    %108 = vector.broadcast %103 : vector<1x32xf32> to vector<8x32xf32>
    %109 = arith.addf %107, %108 : vector<8x32xf32>
    %cst_51 = arith.constant 0.000000e+00 : f32
    %110 = vector.broadcast %cst_51 : f32 to vector<8x32xf32>
    %111 = arith.maximumf %109, %110 : vector<8x32xf32>
    %cst_52 = arith.constant dense<0.000000e+00> : vector<20x32xf32>
    %112 = tpu.matmul %1, %111, %cst_52 {dimension_numbers = #tpu.dot_dimension_numbers<[1], [0], [0], [1], [0, 0, 1, 1], [], []>} : vector<20x8xf32>, vector<8x32xf32>, vector<20x32xf32> -> vector<20x32xf32>
    %cst_53 = arith.constant dense<0.000000e+00> : vector<20x32xf32>
    %113 = tpu.matmul %101, %104, %cst_53 {dimension_numbers = #tpu.dot_dimension_numbers<[1], [0], [0], [1], [0, 0, 1, 1], [], []>} : vector<20x8xf32>, vector<8x32xf32>, vector<20x32xf32> -> vector<20x32xf32>
    %114 = vector.broadcast %105 : vector<1x32xf32> to vector<20x32xf32>
    %115 = arith.addf %113, %114 : vector<20x32xf32>
    %116 = arith.addf %115, %112 : vector<20x32xf32>
    %cst_54 = arith.constant 0.000000e+00 : f32
    %117 = vector.broadcast %cst_54 : f32 to vector<20x32xf32>
    %118 = arith.maximumf %116, %117 : vector<20x32xf32>
    %c128 = arith.constant 128 : index
    %c0_55 = arith.constant 0 : index
    %119 = vector.load %arg3[%c128, %c0_55] : memref<192x128xf32, #tpu.memory_space<vmem>>, vector<32x16xf32>
    %c10 = arith.constant 10 : index
    %c0_56 = arith.constant 0 : index
    %120 = vector.load %arg4[%c10, %c0_56] : memref<16x128xf32, #tpu.memory_space<vmem>>, vector<1x16xf32>
    %c160 = arith.constant 160 : index
    %c0_57 = arith.constant 0 : index
    %121 = vector.load %arg3[%c160, %c0_57] : memref<192x128xf32, #tpu.memory_space<vmem>>, vector<32x16xf32>
    %c11 = arith.constant 11 : index
    %c0_58 = arith.constant 0 : index
    %122 = vector.load %arg4[%c11, %c0_58] : memref<16x128xf32, #tpu.memory_space<vmem>>, vector<1x16xf32>
    %cst_59 = arith.constant dense<0.000000e+00> : vector<8x32xf32>
    %123 = tpu.matmul %0, %118, %cst_59 {dimension_numbers = #tpu.dot_dimension_numbers<[1], [0], [0], [1], [0, 0, 1, 1], [], []>} : vector<8x20xf32>, vector<20x32xf32>, vector<8x32xf32> -> vector<8x32xf32>
    %cst_60 = arith.constant dense<0.000000e+00> : vector<8x16xf32>
    %124 = tpu.matmul %123, %119, %cst_60 {dimension_numbers = #tpu.dot_dimension_numbers<[1], [0], [0], [1], [0, 0, 1, 1], [], []>} : vector<8x32xf32>, vector<32x16xf32>, vector<8x16xf32> -> vector<8x16xf32>
    %125 = vector.broadcast %120 : vector<1x16xf32> to vector<8x16xf32>
    %126 = arith.addf %124, %125 : vector<8x16xf32>
    %cst_61 = arith.constant 0.000000e+00 : f32
    %127 = vector.broadcast %cst_61 : f32 to vector<8x16xf32>
    %128 = arith.maximumf %126, %127 : vector<8x16xf32>
    %cst_62 = arith.constant dense<0.000000e+00> : vector<20x16xf32>
    %129 = tpu.matmul %1, %128, %cst_62 {dimension_numbers = #tpu.dot_dimension_numbers<[1], [0], [0], [1], [0, 0, 1, 1], [], []>} : vector<20x8xf32>, vector<8x16xf32>, vector<20x16xf32> -> vector<20x16xf32>
    %cst_63 = arith.constant dense<0.000000e+00> : vector<20x16xf32>
    %130 = tpu.matmul %118, %121, %cst_63 {dimension_numbers = #tpu.dot_dimension_numbers<[1], [0], [0], [1], [0, 0, 1, 1], [], []>} : vector<20x32xf32>, vector<32x16xf32>, vector<20x16xf32> -> vector<20x16xf32>
    %131 = vector.broadcast %122 : vector<1x16xf32> to vector<20x16xf32>
    %132 = arith.addf %130, %131 : vector<20x16xf32>
    %133 = arith.addf %132, %129 : vector<20x16xf32>
    %cst_64 = arith.constant 0.000000e+00 : f32
    %134 = vector.broadcast %cst_64 : f32 to vector<20x16xf32>
    %135 = arith.maximumf %133, %134 : vector<20x16xf32>
    %136 = tpu.iota {dimensions = array<i32: 0>} : vector<8x20xi32>
    %137 = tpu.iota {dimensions = array<i32: 1>} : vector<8x20xi32>
    %cst_65 = arith.constant 0.000000e+00 : f32
    %138 = vector.broadcast %cst_65 : f32 to vector<8x20xf32>
    %c0_i32 = arith.constant 0 : i32
    %139 = vector.broadcast %c0_i32 : i32 to vector<8x20xi32>
    %140 = arith.cmpi eq, %136, %139 : vector<8x20xi32>
    %c0_66 = arith.constant 0 : index
    %141 = memref.load %arg0[%c0_66] : memref<4xi32, #tpu.memory_space<smem>>
    %142 = vector.broadcast %141 : i32 to vector<8x20xi32>
    %143 = arith.cmpi eq, %137, %142 : vector<8x20xi32>
    %144 = arith.andi %140, %143 : vector<8x20xi1>
    %cst_67 = arith.constant 1.000000e+00 : f32
    %cst_68 = arith.constant 0.000000e+00 : f32
    %145 = vector.broadcast %cst_67 : f32 to vector<8x20xf32>
    %146 = vector.broadcast %cst_68 : f32 to vector<8x20xf32>
    %147 = arith.select %144, %145, %146 : vector<8x20xi1>, vector<8x20xf32>
    %148 = arith.addf %138, %147 : vector<8x20xf32>
    %c1_i32 = arith.constant 1 : i32
    %149 = vector.broadcast %c1_i32 : i32 to vector<8x20xi32>
    %150 = arith.cmpi eq, %136, %149 : vector<8x20xi32>
    %c1_69 = arith.constant 1 : index
    %151 = memref.load %arg0[%c1_69] : memref<4xi32, #tpu.memory_space<smem>>
    %152 = vector.broadcast %151 : i32 to vector<8x20xi32>
    %153 = arith.cmpi eq, %137, %152 : vector<8x20xi32>
    %154 = arith.andi %150, %153 : vector<8x20xi1>
    %cst_70 = arith.constant 1.000000e+00 : f32
    %cst_71 = arith.constant 0.000000e+00 : f32
    %155 = vector.broadcast %cst_70 : f32 to vector<8x20xf32>
    %156 = vector.broadcast %cst_71 : f32 to vector<8x20xf32>
    %157 = arith.select %154, %155, %156 : vector<8x20xi1>, vector<8x20xf32>
    %158 = arith.addf %148, %157 : vector<8x20xf32>
    %c2_i32 = arith.constant 2 : i32
    %159 = vector.broadcast %c2_i32 : i32 to vector<8x20xi32>
    %160 = arith.cmpi eq, %136, %159 : vector<8x20xi32>
    %c2_72 = arith.constant 2 : index
    %161 = memref.load %arg0[%c2_72] : memref<4xi32, #tpu.memory_space<smem>>
    %162 = vector.broadcast %161 : i32 to vector<8x20xi32>
    %163 = arith.cmpi eq, %137, %162 : vector<8x20xi32>
    %164 = arith.andi %160, %163 : vector<8x20xi1>
    %cst_73 = arith.constant 1.000000e+00 : f32
    %cst_74 = arith.constant 0.000000e+00 : f32
    %165 = vector.broadcast %cst_73 : f32 to vector<8x20xf32>
    %166 = vector.broadcast %cst_74 : f32 to vector<8x20xf32>
    %167 = arith.select %164, %165, %166 : vector<8x20xi1>, vector<8x20xf32>
    %168 = arith.addf %158, %167 : vector<8x20xf32>
    %c3_i32 = arith.constant 3 : i32
    %169 = vector.broadcast %c3_i32 : i32 to vector<8x20xi32>
    %170 = arith.cmpi eq, %136, %169 : vector<8x20xi32>
    %c3_75 = arith.constant 3 : index
    %171 = memref.load %arg0[%c3_75] : memref<4xi32, #tpu.memory_space<smem>>
    %172 = vector.broadcast %171 : i32 to vector<8x20xi32>
    %173 = arith.cmpi eq, %137, %172 : vector<8x20xi32>
    %174 = arith.andi %170, %173 : vector<8x20xi1>
    %cst_76 = arith.constant 1.000000e+00 : f32
    %cst_77 = arith.constant 0.000000e+00 : f32
    %175 = vector.broadcast %cst_76 : f32 to vector<8x20xf32>
    %176 = vector.broadcast %cst_77 : f32 to vector<8x20xf32>
    %177 = arith.select %174, %175, %176 : vector<8x20xi1>, vector<8x20xf32>
    %178 = arith.addf %168, %177 : vector<8x20xf32>
    %cst_78 = arith.constant dense<0.000000e+00> : vector<8x16xf32>
    %179 = tpu.matmul %178, %135, %cst_78 {dimension_numbers = #tpu.dot_dimension_numbers<[1], [0], [0], [1], [0, 0, 1, 1], [], []>} : vector<8x20xf32>, vector<20x16xf32>, vector<8x16xf32> -> vector<8x16xf32>
    %cst_79 = arith.constant dense<0.000000e+00> : vector<8x16xf32>
    %180 = tpu.matmul %178, %2, %cst_79 {dimension_numbers = #tpu.dot_dimension_numbers<[1], [0], [0], [1], [0, 0, 1, 1], [], []>} : vector<8x20xf32>, vector<20x16xf32>, vector<8x16xf32> -> vector<8x16xf32>
    %cst_80 = arith.constant 0.000000e+00 : f32
    %181 = vector.broadcast %cst_80 : f32 to vector<48x128xf32>
    %c0_81 = arith.constant 0 : index
    %c0_82 = arith.constant 0 : index
    %182 = vector.load %arg5[%c0_81, %c0_82] : memref<48x128xf32, #tpu.memory_space<vmem>>, vector<48x128xf32>
    tpu.vector_store %arg5[%c0_81, %c0_82], %181 {strides = array<i32>} : memref<48x128xf32, #tpu.memory_space<vmem>>, vector<48x128xf32>,
    %c0_83 = arith.constant 0 : index
    %c0_84 = arith.constant 0 : index
    %183 = vector.load %arg5[%c0_83, %c0_84] : memref<48x128xf32, #tpu.memory_space<vmem>>, vector<20x16xf32>
    tpu.vector_store %arg5[%c0_83, %c0_84], %135 {strides = array<i32>} : memref<48x128xf32, #tpu.memory_space<vmem>>, vector<20x16xf32>,
    %c24 = arith.constant 24 : index
    %c0_85 = arith.constant 0 : index
    %184 = vector.load %arg5[%c24, %c0_85] : memref<48x128xf32, #tpu.memory_space<vmem>>, vector<8x16xf32>
    tpu.vector_store %arg5[%c24, %c0_85], %179 {strides = array<i32>} : memref<48x128xf32, #tpu.memory_space<vmem>>, vector<8x16xf32>,
    %c32_86 = arith.constant 32 : index
    %c0_87 = arith.constant 0 : index
    %185 = vector.load %arg5[%c32_86, %c0_87] : memref<48x128xf32, #tpu.memory_space<vmem>>, vector<8x16xf32>
    tpu.vector_store %arg5[%c32_86, %c0_87], %180 {strides = array<i32>} : memref<48x128xf32, #tpu.memory_space<vmem>>, vector<8x16xf32>,
    %c40 = arith.constant 40 : index
    %c0_88 = arith.constant 0 : index
    %186 = vector.load %arg5[%c40, %c0_88] : memref<48x128xf32, #tpu.memory_space<vmem>>, vector<8x4xf32>
    tpu.vector_store %arg5[%c40, %c0_88], %99 {strides = array<i32>} : memref<48x128xf32, #tpu.memory_space<vmem>>, vector<8x4xf32>,
    return
  }
}

</mosaic_0001>

<llo_original>
// kernel: forward.1
$region0: #{forward.1}
  #allocation0 [shape = 'u32[]', space=smem, size = 0x4, offset = 0x4, fixed_abs, tag = 'smem constant byte address 0x4 - core index']
  #allocation1 [shape = 'u32[144,128]{1,0:T(1,128)}', space=vmem, size = 0x12000, scoped, tag = 'internal scratch']
  %s0 = inlined_call_operand.vmem [shape: s32[4], index: 0, kind: input, shape index: {}]
  %s1 = inlined_call_operand.vmem [shape: f32[20,16], index: 1, kind: input, shape index: {}]
  %s2 = inlined_call_operand.vmem [shape: f32[32,128], index: 2, kind: input, shape index: {}]
  %s3 = inlined_call_operand.hbm [shape: f32[192,128], index: 3, kind: input, shape index: {}]
  %s4 = inlined_call_operand.vmem [shape: f32[16,128], index: 4, kind: input, shape index: {}]
  %s5 = inlined_call_operand.vmem [shape: f32[48,128], index: 5, kind: output, shape index: {}]
  %s6 = sld [smem:[#allocation0]]
  $region38: #{forward.1} parent=0
    _
  %s8 = ssub.s32 1, %s6
  %s9 = scalar_select 0, %s8, %s6
  $region1: #{forward.1} parent=0
    #allocation2 [shape = 'u8[512]{0}', space=smem, size = 0x200, scoped, tag = 'input window, operand 0, single buffered']
    #allocation3 [shape = 's32[1]{0}', space=sflag, size = 0x4, scoped, tag = 'scoped memory for forward.1']
    #allocation4 [shape = 's32[1]{0}', space=sflag, size = 0x4, scoped, tag = 'scoped memory for forward.1']
    #allocation5 [shape = 'u8[98304]{0}', space=vmem, size = 0x18000, scoped, tag = 'input window, operand 3, single buffered']
    %10 = vsyncpa [#allocation4], 0
    %11 = vsyncpa [#allocation3], 0
    // Predicated region
    $region2: #{forward.1} parent=1 // pred_check
      _
    $region3: #{forward.1} parent=1 // pred_check_branch
      %13 = sbr.rel (0) target = $region5
    $region4: #{forward.1} parent=1 // pred_region
      %s15 = ssub.s32 16, 16
      %16 = vsyncadd [#allocation4], %s15
      %s18 = sshll.u32 %s0, 4
      %s19 = int_to_ptr.vmem [resolvable:$true] %s18
      %21 = dma.vmem_to_smem %s19, 16, [#allocation2], [#allocation4]
    $region5: #{forward.1} parent=1 // pred_fallthru
      _
    // Predicated region
    $region6: #{forward.1} parent=1 // pred_check
      _
    $region7: #{forward.1} parent=1 // pred_check_branch
      %23 = sbr.rel (0) target = $region9
    $region8: #{forward.1} parent=1 // pred_region
      _
    $region9: #{forward.1} parent=1 // pred_fallthru
      _
    // Predicated region
    $region10: #{forward.1} parent=1 // pred_check
      _
    $region11: #{forward.1} parent=1 // pred_check_branch
      %25 = sbr.rel (0) target = $region13
    $region12: #{forward.1} parent=1 // pred_region
      _
    $region13: #{forward.1} parent=1 // pred_fallthru
      _
    // Predicated region
    $region14: #{forward.1} parent=1 // pred_check
      _
    $region15: #{forward.1} parent=1 // pred_check_branch
      %27 = sbr.rel (0) target = $region17
    $region16: #{forward.1} parent=1 // pred_region
      %s29 = ssub.s32 3072, 3072
      %30 = vsyncadd [#allocation3], %s29
      %s31 = sshll.u32 [#allocation5], 4
      %s32 = int_to_ptr.vmem [resolvable:$true] %s31
      %37 = dma.hbm_to_vmem [thread:$0]  %s3, 3072, %s32, [#allocation3], 128, 128, 8
    $region17: #{forward.1} parent=1 // pred_fallthru
      _
    // Predicated region
    $region18: #{forward.1} parent=1 // pred_check
      _
    $region19: #{forward.1} parent=1 // pred_check_branch
      %39 = sbr.rel (0) target = $region21
    $region20: #{forward.1} parent=1 // pred_region
      _
    $region21: #{forward.1} parent=1 // pred_fallthru
      _
    // Predicated region
    $region22: #{forward.1} parent=1 // pred_check
      _
    $region23: #{forward.1} parent=1 // pred_check_branch
      %41 = sbr.rel (0) target = $region25
    $region24: #{forward.1} parent=1 // pred_region
      %42 = dma.done [#allocation4], 16
    $region25: #{forward.1} parent=1 // pred_fallthru
      _
    // Predicated region
    $region26: #{forward.1} parent=1 // pred_check
      _
    $region27: #{forward.1} parent=1 // pred_check_branch
      %44 = sbr.rel (0) target = $region29
    $region28: #{forward.1} parent=1 // pred_region
      %45 = dma.done [#allocation3], 3072
    $region29: #{forward.1} parent=1 // pred_fallthru
      _
    %46 = sfence
    %v47 = vld [vmem:[%s2] sm:$0xff]
    %v48 = vld [vmem:[%s2 + $0x8] sm:$0xff]
    %v49 = vld [vmem:[%s2 + $0x10] sm:$0xff]
    %v50 = vld [vmem:[%s2 + $0x18] sm:$0xf]
    %v51 = vld [vmem:[%s1] sm:$0xff]
    %v52 = vld [vmem:[%s1 + $0x8] sm:$0xff]
    %v53 = vld [vmem:[%s1 + $0x10] sm:$0xf]
    %v54 = vld [vmem:[%s4 + $0x7] sm:$0x1]
    %v55 = vlaneseq
    %v56 = vshrl.u32 %v55, 7
    %v57 = vadd.s32 %v56, 8
    %v58 = vadd.s32 %v56, 16
    %s59 = sld [smem:[#allocation2]]
    %v60 = vstv %s59
    %vm61 = vcmp.eq.s32.totalorder %v56, %v60
    %vm62 = vcmp.eq.s32.totalorder %v57, %v60
    %vm63 = vcmp.eq.s32.totalorder %v58, %v60
    %v64 = vsel %vm61, 1, 0
    %v65 = vsel %vm62, 1, 0
    %v66 = vsel %vm63, 1, 0
    %v67 = vcvt.s32.f32 %v64
    %v68 = vcvt.s32.f32 %v65
    %v69 = vcvt.s32.f32 %v66
    %v70 = vmax.f32 %v67, 0.0
    %v71 = vmax.f32 %v68, 0.0
    %v72 = vmax.f32 %v69, 0.0
    %s73 = sld [smem:[#allocation2 + $0x1]]
    %v74 = vstv %s73
    %vm75 = vcmp.eq.s32.totalorder %v56, %v74
    %vm76 = vcmp.eq.s32.totalorder %v57, %v74
    %vm77 = vcmp.eq.s32.totalorder %v58, %v74
    %v78 = vsel %vm75, 1, 0
    %v79 = vsel %vm76, 1, 0
    %v80 = vsel %vm77, 1, 0
    %v81 = vcvt.s32.f32 %v78
    %v82 = vcvt.s32.f32 %v79
    %v83 = vcvt.s32.f32 %v80
    %v84 = vmax.f32 %v70, %v81
    %v85 = vmax.f32 %v71, %v82
    %v86 = vmax.f32 %v72, %v83
    %s87 = sld [smem:[#allocation2 + $0x2]]
    %v88 = vstv %s87
    %vm89 = vcmp.eq.s32.totalorder %v56, %v88
    %vm90 = vcmp.eq.s32.totalorder %v57, %v88
    %vm91 = vcmp.eq.s32.totalorder %v58, %v88
    %v92 = vsel %vm89, 1, 0
    %v93 = vsel %vm90, 1, 0
    %v94 = vsel %vm91, 1, 0
    %v95 = vcvt.s32.f32 %v92
    %v96 = vcvt.s32.f32 %v93
    %v97 = vcvt.s32.f32 %v94
    %v98 = vmax.f32 %v84, %v95
    %v99 = vmax.f32 %v85, %v96
    %v100 = vmax.f32 %v86, %v97
    %s101 = sld [smem:[#allocation2 + $0x3]]
    %v102 = vstv %s101
    %vm103 = vcmp.eq.s32.totalorder %v56, %v102
    %vm104 = vcmp.eq.s32.totalorder %v57, %v102
    %vm105 = vcmp.eq.s32.totalorder %v58, %v102
    %v106 = vsel %vm103, 1, 0
    %v107 = vsel %vm104, 1, 0
    %v108 = vsel %vm105, 1, 0
    %v109 = vcvt.s32.f32 %v106
    %v110 = vcvt.s32.f32 %v107
    %v111 = vcvt.s32.f32 %v108
    %v112 = vmax.f32 %v98, %v109
    %v113 = vmax.f32 %v99, %v110
    %v114 = vmax.f32 %v100, %v111
    %vm115 = vcmp.gt.f32.partialorder %v112, 0.0
    %vm116 = vcmp.gt.f32.partialorder %v113, 0.0
    %vm117 = vcmp.gt.f32.partialorder %v114, 0.0
    %v118 = vsel %vm115, 1, 0
    %v119 = vsel %vm116, 1, 0
    %v120 = vsel %vm117, 1, 0
    %vm121 = vcmp.eq.s32.totalorder %v118, 1
    %vm122 = vcmp.eq.s32.totalorder %v119, 1
    %vm123 = vcmp.eq.s32.totalorder %v120, 1
    %v124 = vlaneseq
    %v125 = vshrl.u32 %v124, 7
    %v126 = vsub.s32 0, %v125
    %v127 = vrot.slane %v54, %v126
    %v128 = vsel %vm121, %v127, %v51
    %v129 = vsel %vm122, %v127, %v52
    %v130 = vsel %vm123, %v127, %v53
    %v131 = vld [vmem:[#allocation5] sm:$0xff]
    %v132 = vld [vmem:[#allocation5 + $0x8] sm:$0xff]
    %v133 = vld [vmem:[%s4] sm:$0x1]
    %v134 = vld [vmem:[#allocation5 + $0x10] sm:$0xff]
    %v135 = vld [vmem:[#allocation5 + $0x18] sm:$0xff]
    %v136 = vld [vmem:[%s4 + $0x1] sm:$0x1]
    %vm137 = vcmask 162816
    %v139 = vsel %vm137, %v47, 0
    %vm141 = vcmask 1043456
    %v143 = vsel %vm141, %v130, 0
    %145 = vmatprep.subr.mxu0 0.0
    %146 = vmatpush1.msra.mxu0 %v128
    %147 = vmatprep.subr.mxu0 0.0
    %148 = vmatpush1.msra.mxu0 %v129
    %149 = vmatprep.subr.mxu0 0.0
    %150 = vmatpush1.msra.mxu0 %v143
    %151 = vmatprep.subr.mxu0 0.0
    %152 = vmatpush1.msra.mxu0 0.0
    %153 = vmatprep.subr.mxu0 0.0
    %154 = vmatpush1.msra.mxu0 0.0
    %155 = vmatprep.subr.mxu0 0.0
    %156 = vmatpush1.msra.mxu0 0.0
    %157 = vmatprep.subr.mxu0 0.0
    %158 = vmatpush1.msra.mxu0 0.0
    %159 = vmatprep.subr.mxu0 0.0
    %160 = vmatpush1.msra.mxu0 0.0
    %161 = vmatprep.subr.mxu0 0.0
    %162 = vmatpush1.msra.mxu0 0.0
    %163 = vmatprep.subr.mxu0 0.0
    %164 = vmatpush1.msra.mxu0 0.0
    %165 = vmatprep.subr.mxu0 0.0
    %166 = vmatpush1.msra.mxu0 0.0
    %167 = vmatprep.subr.mxu0 0.0
    %168 = vmatpush1.msra.mxu0 0.0
    %169 = vmatprep.subr.mxu0 0.0
    %170 = vmatpush1.msra.mxu0 0.0
    %171 = vmatprep.subr.mxu0 0.0
    %172 = vmatpush1.msra.mxu0 0.0
    %173 = vmatprep.subr.mxu0 0.0
    %174 = vmatpush1.msra.mxu0 0.0
    %175 = vmatprep.subr.mxu0 0.0
    %176 = vmatpush1.msra.mxu0 0.0
    %177 = vmatprep.subr.mxu0 0.0
    %178 = vmatpush1.msra.mxu0 0.0
    %179 = vmatprep.subr.mxu0 0.0
    %180 = vmatpush1.msra.mxu0 0.0
    %181 = vmatprep.subr.mxu0 0.0
    %182 = vmatpush1.msra.mxu0 0.0
    %183 = vmatprep.subr.mxu0 0.0
    %184 = vmatpush1.msra.mxu0 0.0
    %185 = vmatprep.subr.mxu0 0.0
    %186 = vmatpush1.msra.mxu0 0.0
    %187 = vmatprep.subr.mxu0 0.0
    %188 = vmatpush1.msra.mxu0 0.0
    %189 = vmatprep.subr.mxu0 0.0
    %190 = vmatpush1.msra.mxu0 0.0
    %191 = vmatprep.subr.mxu0 0.0
    %192 = vmatpush1.msra.mxu0 0.0
    %193 = vmatprep.subr.mxu0 0.0
    %194 = vmatpush1.msra.mxu0 0.0
    %195 = vmatprep.subr.mxu0 0.0
    %196 = vmatpush1.msra.mxu0 0.0
    %197 = vmatprep.subr.mxu0 0.0
    %198 = vmatpush1.msra.mxu0 0.0
    %199 = vmatprep.subr.mxu0 0.0
    %200 = vmatpush1.msra.mxu0 0.0
    %201 = vmatprep.subr.mxu0 0.0
    %202 = vmatpush1.msra.mxu0 0.0
    %203 = vmatprep.subr.mxu0 0.0
    %204 = vmatpush1.msra.mxu0 0.0
    %205 = vmatprep.subr.mxu0 0.0
    %206 = vmatpush1.msra.mxu0 0.0
    %207 = vmatprep.subr.mxu0 0.0
    %208 = vmatpush1.msra.mxu0 0.0
    %209 = vmatprep.mubr.f32.mxu0 0.0
    %210 = vmatmul.mubr.f32.gmra.mrb[0].mxu0 %v139
    %v211 = vpop.f32.mrb[0].mxu0
    %v212 = vadd.f32 0.0, %v211
    %v213 = vpop.f32.mrb[0].mxu0
    %214 = vdwg.mxu0
    %v215 = vlaneseq
    %v216 = vshrl.u32 %v215, 7
    %v217 = vsub.s32 0, %v216
    %v218 = vrot.slane %v133, %v217
    %vm219 = vcmask 130048
    %v221 = vsel %vm219, %v212, 0
    %223 = vmatprep.subr.mxu0 0.0
    %224 = vmatpush1.msra.mxu0 %v131
    %225 = vmatprep.subr.mxu0 0.0
    %226 = vmatpush1.msra.mxu0 %v132
    %227 = vmatprep.subr.mxu0 0.0
    %228 = vmatpush1.msra.mxu0 0.0
    %229 = vmatprep.subr.mxu0 0.0
    %230 = vmatpush1.msra.mxu0 0.0
    %231 = vmatprep.subr.mxu0 0.0
    %232 = vmatpush1.msra.mxu0 0.0
    %233 = vmatprep.subr.mxu0 0.0
    %234 = vmatpush1.msra.mxu0 0.0
    %235 = vmatprep.subr.mxu0 0.0
    %236 = vmatpush1.msra.mxu0 0.0
    %237 = vmatprep.subr.mxu0 0.0
    %238 = vmatpush1.msra.mxu0 0.0
    %239 = vmatprep.subr.mxu0 0.0
    %240 = vmatpush1.msra.mxu0 0.0
    %241 = vmatprep.subr.mxu0 0.0
    %242 = vmatpush1.msra.mxu0 0.0
    %243 = vmatprep.subr.mxu0 0.0
    %244 = vmatpush1.msra.mxu0 0.0
    %245 = vmatprep.subr.mxu0 0.0
    %246 = vmatpush1.msra.mxu0 0.0
    %247 = vmatprep.subr.mxu0 0.0
    %248 = vmatpush1.msra.mxu0 0.0
    %249 = vmatprep.subr.mxu0 0.0
    %250 = vmatpush1.msra.mxu0 0.0
    %251 = vmatprep.subr.mxu0 0.0
    %252 = vmatpush1.msra.mxu0 0.0
    %253 = vmatprep.subr.mxu0 0.0
    %254 = vmatpush1.msra.mxu0 0.0
    %255 = vmatprep.subr.mxu0 0.0
    %256 = vmatpush1.msra.mxu0 0.0
    %257 = vmatprep.subr.mxu0 0.0
    %258 = vmatpush1.msra.mxu0 0.0
    %259 = vmatprep.subr.mxu0 0.0
    %260 = vmatpush1.msra.mxu0 0.0
    %261 = vmatprep.subr.mxu0 0.0
    %262 = vmatpush1.msra.mxu0 0.0
    %263 = vmatprep.subr.mxu0 0.0
    %264 = vmatpush1.msra.mxu0 0.0
    %265 = vmatprep.subr.mxu0 0.0
    %266 = vmatpush1.msra.mxu0 0.0
    %267 = vmatprep.subr.mxu0 0.0
    %268 = vmatpush1.msra.mxu0 0.0
    %269 = vmatprep.subr.mxu0 0.0
    %270 = vmatpush1.msra.mxu0 0.0
    %271 = vmatprep.subr.mxu0 0.0
    %272 = vmatpush1.msra.mxu0 0.0
    %273 = vmatprep.subr.mxu0 0.0
    %274 = vmatpush1.msra.mxu0 0.0
    %275 = vmatprep.subr.mxu0 0.0
    %276 = vmatpush1.msra.mxu0 0.0
    %277 = vmatprep.subr.mxu0 0.0
    %278 = vmatpush1.msra.mxu0 0.0
    %279 = vmatprep.subr.mxu0 0.0
    %280 = vmatpush1.msra.mxu0 0.0
    %281 = vmatprep.subr.mxu0 0.0
    %282 = vmatpush1.msra.mxu0 0.0
    %283 = vmatprep.subr.mxu0 0.0
    %284 = vmatpush1.msra.mxu0 0.0
    %285 = vmatprep.subr.mxu0 0.0
    %286 = vmatpush1.msra.mxu0 0.0
    %287 = vmatprep.mubr.f32.mxu0 0.0
    %288 = vmatmul.mubr.f32.gmra.mrb[0].mxu0 %v221
    %v289 = vpop.f32.mrb[0].mxu0
    %v290 = vadd.f32 %v218, %v289
    %v291 = vpop.f32.mrb[0].mxu0
    %292 = vdwg.mxu0
    %v293 = vmax.f32 %v290, 0.0
    %vm294 = vcmask 64512
    %v296 = vsel %vm294, %v48, 0
    %v299 = vsel %vm294, %v49, 0
    %v302 = vsel %vm294, %v50, 0
    %304 = vmatprep.subr.mxu0 0.0
    %305 = vmatpush1.msra.mxu0 %v293
    %306 = vmatprep.subr.mxu0 0.0
    %307 = vmatpush1.msra.mxu0 0.0
    %308 = vmatprep.subr.mxu0 0.0
    %309 = vmatpush1.msra.mxu0 0.0
    %310 = vmatprep.subr.mxu0 0.0
    %311 = vmatpush1.msra.mxu0 0.0
    %312 = vmatprep.subr.mxu0 0.0
    %313 = vmatpush1.msra.mxu0 0.0
    %314 = vmatprep.subr.mxu0 0.0
    %315 = vmatpush1.msra.mxu0 0.0
    %316 = vmatprep.subr.mxu0 0.0
    %317 = vmatpush1.msra.mxu0 0.0
    %318 = vmatprep.subr.mxu0 0.0
    %319 = vmatpush1.msra.mxu0 0.0
    %320 = vmatprep.subr.mxu0 0.0
    %321 = vmatpush1.msra.mxu0 0.0
    %322 = vmatprep.subr.mxu0 0.0
    %323 = vmatpush1.msra.mxu0 0.0
    %324 = vmatprep.subr.mxu0 0.0
    %325 = vmatpush1.msra.mxu0 0.0
    %326 = vmatprep.subr.mxu0 0.0
    %327 = vmatpush1.msra.mxu0 0.0
    %328 = vmatprep.subr.mxu0 0.0
    %329 = vmatpush1.msra.mxu0 0.0
    %330 = vmatprep.subr.mxu0 0.0
    %331 = vmatpush1.msra.mxu0 0.0
    %332 = vmatprep.subr.mxu0 0.0
    %333 = vmatpush1.msra.mxu0 0.0
    %334 = vmatprep.subr.mxu0 0.0
    %335 = vmatpush1.msra.mxu0 0.0
    %336 = vmatprep.subr.mxu0 0.0
    %337 = vmatpush1.msra.mxu0 0.0
    %338 = vmatprep.subr.mxu0 0.0
    %339 = vmatpush1.msra.mxu0 0.0
    %340 = vmatprep.subr.mxu0 0.0
    %341 = vmatpush1.msra.mxu0 0.0
    %342 = vmatprep.subr.mxu0 0.0
    %343 = vmatpush1.msra.mxu0 0.0
    %344 = vmatprep.subr.mxu0 0.0
    %345 = vmatpush1.msra.mxu0 0.0
    %346 = vmatprep.subr.mxu0 0.0
    %347 = vmatpush1.msra.mxu0 0.0
    %348 = vmatprep.subr.mxu0 0.0
    %349 = vmatpush1.msra.mxu0 0.0
    %350 = vmatprep.subr.mxu0 0.0
    %351 = vmatpush1.msra.mxu0 0.0
    %352 = vmatprep.subr.mxu0 0.0
    %353 = vmatpush1.msra.mxu0 0.0
    %354 = vmatprep.subr.mxu0 0.0
    %355 = vmatpush1.msra.mxu0 0.0
    %356 = vmatprep.subr.mxu0 0.0
    %357 = vmatpush1.msra.mxu0 0.0
    %358 = vmatprep.subr.mxu0 0.0
    %359 = vmatpush1.msra.mxu0 0.0
    %360 = vmatprep.subr.mxu0 0.0
    %361 = vmatpush1.msra.mxu0 0.0
    %362 = vmatprep.subr.mxu0 0.0
    %363 = vmatpush1.msra.mxu0 0.0
    %364 = vmatprep.subr.mxu0 0.0
    %365 = vmatpush1.msra.mxu0 0.0
    %366 = vmatprep.subr.mxu0 0.0
    %367 = vmatpush1.msra.mxu0 0.0
    %368 = vmatprep.mubr.f32.mxu0 0.0
    %369 = vmatmul.mubr.f32.gmra.mrb[0].mxu0 %v296
    %v370 = vpop.f32.mrb[0].mxu0
    %v371 = vadd.f32 0.0, %v370
    %v372 = vpop.f32.mrb[0].mxu0
    %373 = vmatprep.mubr.f32.mxu0 0.0
    %374 = vmatmul.mubr.f32.gmra.mrb[0].mxu0 %v299
    %v375 = vpop.f32.mrb[0].mxu0
    %v376 = vadd.f32 0.0, %v375
    %v377 = vpop.f32.mrb[0].mxu0
    %378 = vmatprep.mubr.f32.mxu0 0.0
    %379 = vmatmul.mubr.f32.gmra.mrb[0].mxu0 %v302
    %v380 = vpop.f32.mrb[0].mxu0
    %v381 = vadd.f32 0.0, %v380
    %v382 = vpop.f32.mrb[0].mxu0
    %383 = vdwg.mxu0
    %v384 = vlaneseq
    %v385 = vshrl.u32 %v384, 7
    %v386 = vsub.s32 0, %v385
    %v387 = vrot.slane %v136, %v386
    %v389 = vsel %vm219, %v128, 0
    %v392 = vsel %vm219, %v129, 0
    %v394 = vsel %vm219, %v130, 0
    %396 = vmatprep.subr.mxu0 0.0
    %397 = vmatpush1.msra.mxu0 %v134
    %398 = vmatprep.subr.mxu0 0.0
    %399 = vmatpush1.msra.mxu0 %v135
    %400 = vmatprep.subr.mxu0 0.0
    %401 = vmatpush1.msra.mxu0 0.0
    %402 = vmatprep.subr.mxu0 0.0
    %403 = vmatpush1.msra.mxu0 0.0
    %404 = vmatprep.subr.mxu0 0.0
    %405 = vmatpush1.msra.mxu0 0.0
    %406 = vmatprep.subr.mxu0 0.0
    %407 = vmatpush1.msra.mxu0 0.0
    %408 = vmatprep.subr.mxu0 0.0
    %409 = vmatpush1.msra.mxu0 0.0
    %410 = vmatprep.subr.mxu0 0.0
    %411 = vmatpush1.msra.mxu0 0.0
    %412 = vmatprep.subr.mxu0 0.0
    %413 = vmatpush1.msra.mxu0 0.0
    %414 = vmatprep.subr.mxu0 0.0
    %415 = vmatpush1.msra.mxu0 0.0
    %416 = vmatprep.subr.mxu0 0.0
    %417 = vmatpush1.msra.mxu0 0.0
    %418 = vmatprep.subr.mxu0 0.0
    %419 = vmatpush1.msra.mxu0 0.0
    %420 = vmatprep.subr.mxu0 0.0
    %421 = vmatpush1.msra.mxu0 0.0
    %422 = vmatprep.subr.mxu0 0.0
    %423 = vmatpush1.msra.mxu0 0.0
    %424 = vmatprep.subr.mxu0 0.0
    %425 = vmatpush1.msra.mxu0 0.0
    %426 = vmatprep.subr.mxu0 0.0
    %427 = vmatpush1.msra.mxu0 0.0
    %428 = vmatprep.subr.mxu0 0.0
    %429 = vmatpush1.msra.mxu0 0.0
    %430 = vmatprep.subr.mxu0 0.0
    %431 = vmatpush1.msra.mxu0 0.0
    %432 = vmatprep.subr.mxu0 0.0
    %433 = vmatpush1.msra.mxu0 0.0
    %434 = vmatprep.subr.mxu0 0.0
    %435 = vmatpush1.msra.mxu0 0.0
    %436 = vmatprep.subr.mxu0 0.0
    %437 = vmatpush1.msra.mxu0 0.0
    %438 = vmatprep.subr.mxu0 0.0
    %439 = vmatpush1.msra.mxu0 0.0
    %440 = vmatprep.subr.mxu0 0.0
    %441 = vmatpush1.msra.mxu0 0.0
    %442 = vmatprep.subr.mxu0 0.0
    %443 = vmatpush1.msra.mxu0 0.0
    %444 = vmatprep.subr.mxu0 0.0
    %445 = vmatpush1.msra.mxu0 0.0
    %446 = vmatprep.subr.mxu0 0.0
    %447 = vmatpush1.msra.mxu0 0.0
    %448 = vmatprep.subr.mxu0 0.0
    %449 = vmatpush1.msra.mxu0 0.0
    %450 = vmatprep.subr.mxu0 0.0
    %451 = vmatpush1.msra.mxu0 0.0
    %452 = vmatprep.subr.mxu0 0.0
    %453 = vmatpush1.msra.mxu0 0.0
    %454 = vmatprep.subr.mxu0 0.0
    %455 = vmatpush1.msra.mxu0 0.0
    %456 = vmatprep.subr.mxu0 0.0
    %457 = vmatpush1.msra.mxu0 0.0
    %458 = vmatprep.subr.mxu0 0.0
    %459 = vmatpush1.msra.mxu0 0.0
    %460 = vmatprep.mubr.f32.mxu0 0.0
    %461 = vmatmul.mubr.f32.gmra.mrb[0].mxu0 %v389
    %v462 = vpop.f32.mrb[0].mxu0
    %v463 = vadd.f32 %v387, %v462
    %v464 = vpop.f32.mrb[0].mxu0
    %465 = vmatprep.mubr.f32.mxu0 0.0
    %466 = vmatmul.mubr.f32.gmra.mrb[0].mxu0 %v392
    %v467 = vpop.f32.mrb[0].mxu0
    %v468 = vadd.f32 %v387, %v467
    %v469 = vpop.f32.mrb[0].mxu0
    %470 = vmatprep.mubr.f32.mxu0 0.0
    %471 = vmatmul.mubr.f32.gmra.mrb[0].mxu0 %v394
    %v472 = vpop.f32.mrb[0].mxu0
    %v473 = vadd.f32 %v387, %v472
    %v474 = vpop.f32.mrb[0].mxu0
    %475 = vdwg.mxu0
    %v476 = vadd.f32 %v463, %v371
    %v477 = vadd.f32 %v468, %v376
    %v478 = vadd.f32 %v473, %v381
    %v479 = vmax.f32 %v476, 0.0
    %v480 = vmax.f32 %v477, 0.0
    %v481 = vmax.f32 %v478, 0.0
    %v482 = vld [vmem:[#allocation5 + $0x20] sm:$0xff]
    %v483 = vld [vmem:[#allocation5 + $0x28] sm:$0xff]
    %v484 = vld [vmem:[#allocation5 + $0x30] sm:$0xff]
    %v485 = vld [vmem:[#allocation5 + $0x38] sm:$0xff]
    %v486 = vld [vmem:[%s4 + $0x2] sm:$0x1]
    %v487 = vld [vmem:[#allocation5 + $0x40] sm:$0xff]
    %v488 = vld [vmem:[#allocation5 + $0x48] sm:$0xff]
    %v489 = vld [vmem:[#allocation5 + $0x50] sm:$0xff]
    %v490 = vld [vmem:[#allocation5 + $0x58] sm:$0xff]
    %v491 = vld [vmem:[%s4 + $0x3] sm:$0x1]
    %v493 = vsel %vm141, %v481, 0
    %495 = vmatprep.subr.mxu0 0.0
    %496 = vmatpush1.msra.mxu0 %v479
    %497 = vmatprep.subr.mxu0 0.0
    %498 = vmatpush1.msra.mxu0 %v480
    %499 = vmatprep.subr.mxu0 0.0
    %500 = vmatpush1.msra.mxu0 %v493
    %501 = vmatprep.subr.mxu0 0.0
    %502 = vmatpush1.msra.mxu0 0.0
    %503 = vmatprep.subr.mxu0 0.0
    %504 = vmatpush1.msra.mxu0 0.0
    %505 = vmatprep.subr.mxu0 0.0
    %506 = vmatpush1.msra.mxu0 0.0
    %507 = vmatprep.subr.mxu0 0.0
    %508 = vmatpush1.msra.mxu0 0.0
    %509 = vmatprep.subr.mxu0 0.0
    %510 = vmatpush1.msra.mxu0 0.0
    %511 = vmatprep.subr.mxu0 0.0
    %512 = vmatpush1.msra.mxu0 0.0
    %513 = vmatprep.subr.mxu0 0.0
    %514 = vmatpush1.msra.mxu0 0.0
    %515 = vmatprep.subr.mxu0 0.0
    %516 = vmatpush1.msra.mxu0 0.0
    %517 = vmatprep.subr.mxu0 0.0
    %518 = vmatpush1.msra.mxu0 0.0
    %519 = vmatprep.subr.mxu0 0.0
    %520 = vmatpush1.msra.mxu0 0.0
    %521 = vmatprep.subr.mxu0 0.0
    %522 = vmatpush1.msra.mxu0 0.0
    %523 = vmatprep.subr.mxu0 0.0
    %524 = vmatpush1.msra.mxu0 0.0
    %525 = vmatprep.subr.mxu0 0.0
    %526 = vmatpush1.msra.mxu0 0.0
    %527 = vmatprep.subr.mxu0 0.0
    %528 = vmatpush1.msra.mxu0 0.0
    %529 = vmatprep.subr.mxu0 0.0
    %530 = vmatpush1.msra.mxu0 0.0
    %531 = vmatprep.subr.mxu0 0.0
    %532 = vmatpush1.msra.mxu0 0.0
    %533 = vmatprep.subr.mxu0 0.0
    %534 = vmatpush1.msra.mxu0 0.0
    %535 = vmatprep.subr.mxu0 0.0
    %536 = vmatpush1.msra.mxu0 0.0
    %537 = vmatprep.subr.mxu0 0.0
    %538 = vmatpush1.msra.mxu0 0.0
    %539 = vmatprep.subr.mxu0 0.0
    %540 = vmatpush1.msra.mxu0 0.0
    %541 = vmatprep.subr.mxu0 0.0
    %542 = vmatpush1.msra.mxu0 0.0
    %543 = vmatprep.subr.mxu0 0.0
    %544 = vmatpush1.msra.mxu0 0.0
    %545 = vmatprep.subr.mxu0 0.0
    %546 = vmatpush1.msra.mxu0 0.0
    %547 = vmatprep.subr.mxu0 0.0
    %548 = vmatpush1.msra.mxu0 0.0
    %549 = vmatprep.subr.mxu0 0.0
    %550 = vmatpush1.msra.mxu0 0.0
    %551 = vmatprep.subr.mxu0 0.0
    %552 = vmatpush1.msra.mxu0 0.0
    %553 = vmatprep.subr.mxu0 0.0
    %554 = vmatpush1.msra.mxu0 0.0
    %555 = vmatprep.subr.mxu0 0.0
    %556 = vmatpush1.msra.mxu0 0.0
    %557 = vmatprep.subr.mxu0 0.0
    %558 = vmatpush1.msra.mxu0 0.0
    %559 = vmatprep.mubr.f32.mxu0 0.0
    %560 = vmatmul.mubr.f32.gmra.mrb[0].mxu0 %v139
    %v561 = vpop.f32.mrb[0].mxu0
    %v562 = vadd.f32 0.0, %v561
    %v563 = vpop.f32.mrb[0].mxu0
    %564 = vdwg.mxu0
    %v565 = vlaneseq
    %v566 = vshrl.u32 %v565, 7
    %v567 = vsub.s32 0, %v566
    %v568 = vrot.slane %v486, %v567
    %vm569 = vcmask 261120
    %v571 = vsel %vm569, %v562, 0
    %573 = vmatprep.subr.mxu0 0.0
    %574 = vmatpush1.msra.mxu0 %v482
    %575 = vmatprep.subr.mxu0 0.0
    %576 = vmatpush1.msra.mxu0 %v483
    %577 = vmatprep.subr.mxu0 0.0
    %578 = vmatpush1.msra.mxu0 %v484
    %579 = vmatprep.subr.mxu0 0.0
    %580 = vmatpush1.msra.mxu0 %v485
    %581 = vmatprep.subr.mxu0 0.0
    %582 = vmatpush1.msra.mxu0 0.0
    %583 = vmatprep.subr.mxu0 0.0
    %584 = vmatpush1.msra.mxu0 0.0
    %585 = vmatprep.subr.mxu0 0.0
    %586 = vmatpush1.msra.mxu0 0.0
    %587 = vmatprep.subr.mxu0 0.0
    %588 = vmatpush1.msra.mxu0 0.0
    %589 = vmatprep.subr.mxu0 0.0
    %590 = vmatpush1.msra.mxu0 0.0
    %591 = vmatprep.subr.mxu0 0.0
    %592 = vmatpush1.msra.mxu0 0.0
    %593 = vmatprep.subr.mxu0 0.0
    %594 = vmatpush1.msra.mxu0 0.0
    %595 = vmatprep.subr.mxu0 0.0
    %596 = vmatpush1.msra.mxu0 0.0
    %597 = vmatprep.subr.mxu0 0.0
    %598 = vmatpush1.msra.mxu0 0.0
    %599 = vmatprep.subr.mxu0 0.0
    %600 = vmatpush1.msra.mxu0 0.0
    %601 = vmatprep.subr.mxu0 0.0
    %602 = vmatpush1.msra.mxu0 0.0
    %603 = vmatprep.subr.mxu0 0.0
    %604 = vmatpush1.msra.mxu0 0.0
    %605 = vmatprep.subr.mxu0 0.0
    %606 = vmatpush1.msra.mxu0 0.0
    %607 = vmatprep.subr.mxu0 0.0
    %608 = vmatpush1.msra.mxu0 0.0
    %609 = vmatprep.subr.mxu0 0.0
    %610 = vmatpush1.msra.mxu0 0.0
    %611 = vmatprep.subr.mxu0 0.0
    %612 = vmatpush1.msra.mxu0 0.0
    %613 = vmatprep.subr.mxu0 0.0
    %614 = vmatpush1.msra.mxu0 0.0
    %615 = vmatprep.subr.mxu0 0.0
    %616 = vmatpush1.msra.mxu0 0.0
    %617 = vmatprep.subr.mxu0 0.0
    %618 = vmatpush1.msra.mxu0 0.0
    %619 = vmatprep.subr.mxu0 0.0
    %620 = vmatpush1.msra.mxu0 0.0
    %621 = vmatprep.subr.mxu0 0.0
    %622 = vmatpush1.msra.mxu0 0.0
    %623 = vmatprep.subr.mxu0 0.0
    %624 = vmatpush1.msra.mxu0 0.0
    %625 = vmatprep.subr.mxu0 0.0
    %626 = vmatpush1.msra.mxu0 0.0
    %627 = vmatprep.subr.mxu0 0.0
    %628 = vmatpush1.msra.mxu0 0.0
    %629 = vmatprep.subr.mxu0 0.0
    %630 = vmatpush1.msra.mxu0 0.0
    %631 = vmatprep.subr.mxu0 0.0
    %632 = vmatpush1.msra.mxu0 0.0
    %633 = vmatprep.subr.mxu0 0.0
    %634 = vmatpush1.msra.mxu0 0.0
    %635 = vmatprep.subr.mxu0 0.0
    %636 = vmatpush1.msra.mxu0 0.0
    %637 = vmatprep.mubr.f32.mxu0 0.0
    %638 = vmatmul.mubr.f32.gmra.mrb[0].mxu0 %v571
    %v639 = vpop.f32.mrb[0].mxu0
    %v640 = vadd.f32 %v568, %v639
    %v641 = vpop.f32.mrb[0].mxu0
    %642 = vdwg.mxu0
    %v643 = vmax.f32 %v640, 0.0
    %644 = vmatprep.subr.mxu0 0.0
    %645 = vmatpush1.msra.mxu0 %v643
    %646 = vmatprep.subr.mxu0 0.0
    %647 = vmatpush1.msra.mxu0 0.0
    %648 = vmatprep.subr.mxu0 0.0
    %649 = vmatpush1.msra.mxu0 0.0
    %650 = vmatprep.subr.mxu0 0.0
    %651 = vmatpush1.msra.mxu0 0.0
    %652 = vmatprep.subr.mxu0 0.0
    %653 = vmatpush1.msra.mxu0 0.0
    %654 = vmatprep.subr.mxu0 0.0
    %655 = vmatpush1.msra.mxu0 0.0
    %656 = vmatprep.subr.mxu0 0.0
    %657 = vmatpush1.msra.mxu0 0.0
    %658 = vmatprep.subr.mxu0 0.0
    %659 = vmatpush1.msra.mxu0 0.0
    %660 = vmatprep.subr.mxu0 0.0
    %661 = vmatpush1.msra.mxu0 0.0
    %662 = vmatprep.subr.mxu0 0.0
    %663 = vmatpush1.msra.mxu0 0.0
    %664 = vmatprep.subr.mxu0 0.0
    %665 = vmatpush1.msra.mxu0 0.0
    %666 = vmatprep.subr.mxu0 0.0
    %667 = vmatpush1.msra.mxu0 0.0
    %668 = vmatprep.subr.mxu0 0.0
    %669 = vmatpush1.msra.mxu0 0.0
    %670 = vmatprep.subr.mxu0 0.0
    %671 = vmatpush1.msra.mxu0 0.0
    %672 = vmatprep.subr.mxu0 0.0
    %673 = vmatpush1.msra.mxu0 0.0
    %674 = vmatprep.subr.mxu0 0.0
    %675 = vmatpush1.msra.mxu0 0.0
    %676 = vmatprep.subr.mxu0 0.0
    %677 = vmatpush1.msra.mxu0 0.0
    %678 = vmatprep.subr.mxu0 0.0
    %679 = vmatpush1.msra.mxu0 0.0
    %680 = vmatprep.subr.mxu0 0.0
    %681 = vmatpush1.msra.mxu0 0.0
    %682 = vmatprep.subr.mxu0 0.0
    %683 = vmatpush1.msra.mxu0 0.0
    %684 = vmatprep.subr.mxu0 0.0
    %685 = vmatpush1.msra.mxu0 0.0
    %686 = vmatprep.subr.mxu0 0.0
    %687 = vmatpush1.msra.mxu0 0.0
    %688 = vmatprep.subr.mxu0 0.0
    %689 = vmatpush1.msra.mxu0 0.0
    %690 = vmatprep.subr.mxu0 0.0
    %691 = vmatpush1.msra.mxu0 0.0
    %692 = vmatprep.subr.mxu0 0.0
    %693 = vmatpush1.msra.mxu0 0.0
    %694 = vmatprep.subr.mxu0 0.0
    %695 = vmatpush1.msra.mxu0 0.0
    %696 = vmatprep.subr.mxu0 0.0
    %697 = vmatpush1.msra.mxu0 0.0
    %698 = vmatprep.subr.mxu0 0.0
    %699 = vmatpush1.msra.mxu0 0.0
    %700 = vmatprep.subr.mxu0 0.0
    %701 = vmatpush1.msra.mxu0 0.0
    %702 = vmatprep.subr.mxu0 0.0
    %703 = vmatpush1.msra.mxu0 0.0
    %704 = vmatprep.subr.mxu0 0.0
    %705 = vmatpush1.msra.mxu0 0.0
    %706 = vmatprep.subr.mxu0 0.0
    %707 = vmatpush1.msra.mxu0 0.0
    %708 = vmatprep.mubr.f32.mxu0 0.0
    %709 = vmatmul.mubr.f32.gmra.mrb[0].mxu0 %v296
    %v710 = vpop.f32.mrb[0].mxu0
    %v711 = vadd.f32 0.0, %v710
    %v712 = vpop.f32.mrb[0].mxu0
    %713 = vmatprep.mubr.f32.mxu0 0.0
    %714 = vmatmul.mubr.f32.gmra.mrb[0].mxu0 %v299
    %v715 = vpop.f32.mrb[0].mxu0
    %v716 = vadd.f32 0.0, %v715
    %v717 = vpop.f32.mrb[0].mxu0
    %718 = vmatprep.mubr.f32.mxu0 0.0
    %719 = vmatmul.mubr.f32.gmra.mrb[0].mxu0 %v302
    %v720 = vpop.f32.mrb[0].mxu0
    %v721 = vadd.f32 0.0, %v720
    %v722 = vpop.f32.mrb[0].mxu0
    %723 = vdwg.mxu0
    %v724 = vlaneseq
    %v725 = vshrl.u32 %v724, 7
    %v726 = vsub.s32 0, %v725
    %v727 = vrot.slane %v491, %v726
    %v729 = vsel %vm569, %v479, 0
    %v732 = vsel %vm569, %v480, 0
    %v734 = vsel %vm569, %v481, 0
    %736 = vmatprep.subr.mxu0 0.0
    %737 = vmatpush1.msra.mxu0 %v487
    %738 = vmatprep.subr.mxu0 0.0
    %739 = vmatpush1.msra.mxu0 %v488
    %740 = vmatprep.subr.mxu0 0.0
    %741 = vmatpush1.msra.mxu0 %v489
    %742 = vmatprep.subr.mxu0 0.0
    %743 = vmatpush1.msra.mxu0 %v490
    %744 = vmatprep.subr.mxu0 0.0
    %745 = vmatpush1.msra.mxu0 0.0
    %746 = vmatprep.subr.mxu0 0.0
    %747 = vmatpush1.msra.mxu0 0.0
    %748 = vmatprep.subr.mxu0 0.0
    %749 = vmatpush1.msra.mxu0 0.0
    %750 = vmatprep.subr.mxu0 0.0
    %751 = vmatpush1.msra.mxu0 0.0
    %752 = vmatprep.subr.mxu0 0.0
    %753 = vmatpush1.msra.mxu0 0.0
    %754 = vmatprep.subr.mxu0 0.0
    %755 = vmatpush1.msra.mxu0 0.0
    %756 = vmatprep.subr.mxu0 0.0
    %757 = vmatpush1.msra.mxu0 0.0
    %758 = vmatprep.subr.mxu0 0.0
    %759 = vmatpush1.msra.mxu0 0.0
    %760 = vmatprep.subr.mxu0 0.0
    %761 = vmatpush1.msra.mxu0 0.0
    %762 = vmatprep.subr.mxu0 0.0
    %763 = vmatpush1.msra.mxu0 0.0
    %764 = vmatprep.subr.mxu0 0.0
    %765 = vmatpush1.msra.mxu0 0.0
    %766 = vmatprep.subr.mxu0 0.0
    %767 = vmatpush1.msra.mxu0 0.0
    %768 = vmatprep.subr.mxu0 0.0
    %769 = vmatpush1.msra.mxu0 0.0
    %770 = vmatprep.subr.mxu0 0.0
    %771 = vmatpush1.msra.mxu0 0.0
    %772 = vmatprep.subr.mxu0 0.0
    %773 = vmatpush1.msra.mxu0 0.0
    %774 = vmatprep.subr.mxu0 0.0
    %775 = vmatpush1.msra.mxu0 0.0
    %776 = vmatprep.subr.mxu0 0.0
    %777 = vmatpush1.msra.mxu0 0.0
    %778 = vmatprep.subr.mxu0 0.0
    %779 = vmatpush1.msra.mxu0 0.0
    %780 = vmatprep.subr.mxu0 0.0
    %781 = vmatpush1.msra.mxu0 0.0
    %782 = vmatprep.subr.mxu0 0.0
    %783 = vmatpush1.msra.mxu0 0.0
    %784 = vmatprep.subr.mxu0 0.0
    %785 = vmatpush1.msra.mxu0 0.0
    %786 = vmatprep.subr.mxu0 0.0
    %787 = vmatpush1.msra.mxu0 0.0
    %788 = vmatprep.subr.mxu0 0.0
    %789 = vmatpush1.msra.mxu0 0.0
    %790 = vmatprep.subr.mxu0 0.0
    %791 = vmatpush1.msra.mxu0 0.0
    %792 = vmatprep.subr.mxu0 0.0
    %793 = vmatpush1.msra.mxu0 0.0
    %794 = vmatprep.subr.mxu0 0.0
    %795 = vmatpush1.msra.mxu0 0.0
    %796 = vmatprep.subr.mxu0 0.0
    %797 = vmatpush1.msra.mxu0 0.0
    %798 = vmatprep.subr.mxu0 0.0
    %799 = vmatpush1.msra.mxu0 0.0
    %800 = vmatprep.mubr.f32.mxu0 0.0
    %801 = vmatmul.mubr.f32.gmra.mrb[0].mxu0 %v729
    %v802 = vpop.f32.mrb[0].mxu0
    %v803 = vadd.f32 %v727, %v802
    %v804 = vpop.f32.mrb[0].mxu0
    %805 = vmatprep.mubr.f32.mxu0 0.0
    %806 = vmatmul.mubr.f32.gmra.mrb[0].mxu0 %v732
    %v807 = vpop.f32.mrb[0].mxu0
    %v808 = vadd.f32 %v727, %v807
    %v809 = vpop.f32.mrb[0].mxu0
    %810 = vmatprep.mubr.f32.mxu0 0.0
    %811 = vmatmul.mubr.f32.gmra.mrb[0].mxu0 %v734
    %v812 = vpop.f32.mrb[0].mxu0
    %v813 = vadd.f32 %v727, %v812
    %v814 = vpop.f32.mrb[0].mxu0
    %815 = vdwg.mxu0
    %v816 = vadd.f32 %v803, %v711
    %v817 = vadd.f32 %v808, %v716
    %v818 = vadd.f32 %v813, %v721
    %v819 = vmax.f32 %v816, 0.0
    %v820 = vmax.f32 %v817, 0.0
    %v821 = vmax.f32 %v818, 0.0
    %v822 = vld [vmem:[#allocation5 + $0x60] sm:$0xff]
    %v823 = vld [vmem:[%s4 + $0x4] sm:$0x1]
    %v824 = vlaneseq
    %v825 = vshrl.u32 %v824, 7
    %v826 = vsub.s32 0, %v825
    %v827 = vrot.slane %v823, %v826
    %v829 = vsel %vm294, %v643, 0
    %831 = vmatprep.subr.mxu0 0.0
    %832 = vmatpush1.msra.mxu0 %v822
    %833 = vmatprep.subr.mxu0 0.0
    %834 = vmatpush1.msra.mxu0 0.0
    %835 = vmatprep.subr.mxu0 0.0
    %836 = vmatpush1.msra.mxu0 0.0
    %837 = vmatprep.subr.mxu0 0.0
    %838 = vmatpush1.msra.mxu0 0.0
    %839 = vmatprep.subr.mxu0 0.0
    %840 = vmatpush1.msra.mxu0 0.0
    %841 = vmatprep.subr.mxu0 0.0
    %842 = vmatpush1.msra.mxu0 0.0
    %843 = vmatprep.subr.mxu0 0.0
    %844 = vmatpush1.msra.mxu0 0.0
    %845 = vmatprep.subr.mxu0 0.0
    %846 = vmatpush1.msra.mxu0 0.0
    %847 = vmatprep.subr.mxu0 0.0
    %848 = vmatpush1.msra.mxu0 0.0
    %849 = vmatprep.subr.mxu0 0.0
    %850 = vmatpush1.msra.mxu0 0.0
    %851 = vmatprep.subr.mxu0 0.0
    %852 = vmatpush1.msra.mxu0 0.0
    %853 = vmatprep.subr.mxu0 0.0
    %854 = vmatpush1.msra.mxu0 0.0
    %855 = vmatprep.subr.mxu0 0.0
    %856 = vmatpush1.msra.mxu0 0.0
    %857 = vmatprep.subr.mxu0 0.0
    %858 = vmatpush1.msra.mxu0 0.0
    %859 = vmatprep.subr.mxu0 0.0
    %860 = vmatpush1.msra.mxu0 0.0
    %861 = vmatprep.subr.mxu0 0.0
    %862 = vmatpush1.msra.mxu0 0.0
    %863 = vmatprep.subr.mxu0 0.0
    %864 = vmatpush1.msra.mxu0 0.0
    %865 = vmatprep.subr.mxu0 0.0
    %866 = vmatpush1.msra.mxu0 0.0
    %867 = vmatprep.subr.mxu0 0.0
    %868 = vmatpush1.msra.mxu0 0.0
    %869 = vmatprep.subr.mxu0 0.0
    %870 = vmatpush1.msra.mxu0 0.0
    %871 = vmatprep.subr.mxu0 0.0
    %872 = vmatpush1.msra.mxu0 0.0
    %873 = vmatprep.subr.mxu0 0.0
    %874 = vmatpush1.msra.mxu0 0.0
    %875 = vmatprep.subr.mxu0 0.0
    %876 = vmatpush1.msra.mxu0 0.0
    %877 = vmatprep.subr.mxu0 0.0
    %878 = vmatpush1.msra.mxu0 0.0
    %879 = vmatprep.subr.mxu0 0.0
    %880 = vmatpush1.msra.mxu0 0.0
    %881 = vmatprep.subr.mxu0 0.0
    %882 = vmatpush1.msra.mxu0 0.0
    %883 = vmatprep.subr.mxu0 0.0
    %884 = vmatpush1.msra.mxu0 0.0
    %885 = vmatprep.subr.mxu0 0.0
    %886 = vmatpush1.msra.mxu0 0.0
    %887 = vmatprep.subr.mxu0 0.0
    %888 = vmatpush1.msra.mxu0 0.0
    %889 = vmatprep.subr.mxu0 0.0
    %890 = vmatpush1.msra.mxu0 0.0
    %891 = vmatprep.subr.mxu0 0.0
    %892 = vmatpush1.msra.mxu0 0.0
    %893 = vmatprep.subr.mxu0 0.0
    %894 = vmatpush1.msra.mxu0 0.0
    %895 = vmatprep.mubr.f32.mxu0 0.0
    %896 = vmatmul.mubr.f32.gmra.mrb[0].mxu0 %v829
    %v897 = vpop.f32.mrb[0].mxu0
    %v898 = vadd.f32 %v827, %v897
    %v899 = vpop.f32.mrb[0].mxu0
    %900 = vdwg.mxu0
    %vm901 = vcmask 31744
    %v902 = vsel %vm901, %v898, 0.0
    %903 = vadd.xlane.f32.xlu0 %v902
    %v904 = vpop.xlane.xlu0 %903
    %v905 = vrcp.pop 4.0
    %v906 = vmul.f32 %v904, %v905
    %v907 = vsub.f32 %v898, %v906
    %v908 = vmul.f32 %v907, %v907
    %v909 = vsel %vm901, %v908, 0.0
    %910 = vadd.xlane.f32.xlu0 %v909
    %v911 = vpop.xlane.xlu0 %910
    %v912 = vmul.f32 %v911, %v905
    %v913 = vadd.f32 %v912, 1e-05
    %v914 = vrsqrt.pop %v913
    %v915 = vmul.f32 %v907, %v914
    %v916 = vld [vmem:[%s4 + $0x5] sm:$0x1]
    %v917 = vlaneseq
    %v918 = vshrl.u32 %v917, 7
    %v919 = vsub.s32 0, %v918
    %v920 = vrot.slane %v916, %v919
    %v921 = vmul.f32 %v915, %v920
    %v922 = vld [vmem:[%s4 + $0x6] sm:$0x1]
    %v923 = vlaneseq
    %v924 = vshrl.u32 %v923, 7
    %v925 = vsub.s32 0, %v924
    %v926 = vrot.slane %v922, %v925
    %v927 = vadd.f32 %v921, %v926
    %v928 = vld [vmem:[#allocation5 + $0x68] sm:$0xff]
    %v930 = vsel %vm294, %v819, 0
    %v933 = vsel %vm294, %v820, 0
    %v936 = vsel %vm294, %v821, 0
    %938 = vmatprep.subr.mxu0 0.0
    %939 = vmatpush1.msra.mxu0 %v928
    %940 = vmatprep.subr.mxu0 0.0
    %941 = vmatpush1.msra.mxu0 0.0
    %942 = vmatprep.subr.mxu0 0.0
    %943 = vmatpush1.msra.mxu0 0.0
    %944 = vmatprep.subr.mxu0 0.0
    %945 = vmatpush1.msra.mxu0 0.0
    %946 = vmatprep.subr.mxu0 0.0
    %947 = vmatpush1.msra.mxu0 0.0
    %948 = vmatprep.subr.mxu0 0.0
    %949 = vmatpush1.msra.mxu0 0.0
    %950 = vmatprep.subr.mxu0 0.0
    %951 = vmatpush1.msra.mxu0 0.0
    %952 = vmatprep.subr.mxu0 0.0
    %953 = vmatpush1.msra.mxu0 0.0
    %954 = vmatprep.subr.mxu0 0.0
    %955 = vmatpush1.msra.mxu0 0.0
    %956 = vmatprep.subr.mxu0 0.0
    %957 = vmatpush1.msra.mxu0 0.0
    %958 = vmatprep.subr.mxu0 0.0
    %959 = vmatpush1.msra.mxu0 0.0
    %960 = vmatprep.subr.mxu0 0.0
    %961 = vmatpush1.msra.mxu0 0.0
    %962 = vmatprep.subr.mxu0 0.0
    %963 = vmatpush1.msra.mxu0 0.0
    %964 = vmatprep.subr.mxu0 0.0
    %965 = vmatpush1.msra.mxu0 0.0
    %966 = vmatprep.subr.mxu0 0.0
    %967 = vmatpush1.msra.mxu0 0.0
    %968 = vmatprep.subr.mxu0 0.0
    %969 = vmatpush1.msra.mxu0 0.0
    %970 = vmatprep.subr.mxu0 0.0
    %971 = vmatpush1.msra.mxu0 0.0
    %972 = vmatprep.subr.mxu0 0.0
    %973 = vmatpush1.msra.mxu0 0.0
    %974 = vmatprep.subr.mxu0 0.0
    %975 = vmatpush1.msra.mxu0 0.0
    %976 = vmatprep.subr.mxu0 0.0
    %977 = vmatpush1.msra.mxu0 0.0
    %978 = vmatprep.subr.mxu0 0.0
    %979 = vmatpush1.msra.mxu0 0.0
    %980 = vmatprep.subr.mxu0 0.0
    %981 = vmatpush1.msra.mxu0 0.0
    %982 = vmatprep.subr.mxu0 0.0
    %983 = vmatpush1.msra.mxu0 0.0
    %984 = vmatprep.subr.mxu0 0.0
    %985 = vmatpush1.msra.mxu0 0.0
    %986 = vmatprep.subr.mxu0 0.0
    %987 = vmatpush1.msra.mxu0 0.0
    %988 = vmatprep.subr.mxu0 0.0
    %989 = vmatpush1.msra.mxu0 0.0
    %990 = vmatprep.subr.mxu0 0.0
    %991 = vmatpush1.msra.mxu0 0.0
    %992 = vmatprep.subr.mxu0 0.0
    %993 = vmatpush1.msra.mxu0 0.0
    %994 = vmatprep.subr.mxu0 0.0
    %995 = vmatpush1.msra.mxu0 0.0
    %996 = vmatprep.subr.mxu0 0.0
    %997 = vmatpush1.msra.mxu0 0.0
    %998 = vmatprep.subr.mxu0 0.0
    %999 = vmatpush1.msra.mxu0 0.0
    %1000 = vmatprep.subr.mxu0 0.0
    %1001 = vmatpush1.msra.mxu0 0.0
    %1002 = vmatprep.mubr.f32.mxu0 0.0
    %1003 = vmatmul.mubr.f32.gmra.mrb[0].mxu0 %v930
    %v1004 = vpop.f32.mrb[0].mxu0
    %v1005 = vadd.f32 0.0, %v1004
    %v1006 = vpop.f32.mrb[0].mxu0
    %1007 = vmatprep.mubr.f32.mxu0 0.0
    %1008 = vmatmul.mubr.f32.gmra.mrb[0].mxu0 %v933
    %v1009 = vpop.f32.mrb[0].mxu0
    %v1010 = vadd.f32 0.0, %v1009
    %v1011 = vpop.f32.mrb[0].mxu0
    %1012 = vmatprep.mubr.f32.mxu0 0.0
    %1013 = vmatmul.mubr.f32.gmra.mrb[0].mxu0 %v936
    %v1014 = vpop.f32.mrb[0].mxu0
    %v1015 = vadd.f32 0.0, %v1014
    %v1016 = vpop.f32.mrb[0].mxu0
    %1017 = vdwg.mxu0
    %v1018 = vld [vmem:[#allocation5 + $0x70] sm:$0xff]
    %v1019 = vld [vmem:[%s4 + $0x8] sm:$0x1]
    %v1020 = vld [vmem:[#allocation5 + $0x78] sm:$0xff]
    %v1021 = vld [vmem:[%s4 + $0x9] sm:$0x1]
    %v1023 = vsel %vm141, %v1015, 0
    %1025 = vmatprep.subr.mxu0 0.0
    %1026 = vmatpush1.msra.mxu0 %v1005
    %1027 = vmatprep.subr.mxu0 0.0
    %1028 = vmatpush1.msra.mxu0 %v1010
    %1029 = vmatprep.subr.mxu0 0.0
    %1030 = vmatpush1.msra.mxu0 %v1023
    %1031 = vmatprep.subr.mxu0 0.0
    %1032 = vmatpush1.msra.mxu0 0.0
    %1033 = vmatprep.subr.mxu0 0.0
    %1034 = vmatpush1.msra.mxu0 0.0
    %1035 = vmatprep.subr.mxu0 0.0
    %1036 = vmatpush1.msra.mxu0 0.0
    %1037 = vmatprep.subr.mxu0 0.0
    %1038 = vmatpush1.msra.mxu0 0.0
    %1039 = vmatprep.subr.mxu0 0.0
    %1040 = vmatpush1.msra.mxu0 0.0
    %1041 = vmatprep.subr.mxu0 0.0
    %1042 = vmatpush1.msra.mxu0 0.0
    %1043 = vmatprep.subr.mxu0 0.0
    %1044 = vmatpush1.msra.mxu0 0.0
    %1045 = vmatprep.subr.mxu0 0.0
    %1046 = vmatpush1.msra.mxu0 0.0
    %1047 = vmatprep.subr.mxu0 0.0
    %1048 = vmatpush1.msra.mxu0 0.0
    %1049 = vmatprep.subr.mxu0 0.0
    %1050 = vmatpush1.msra.mxu0 0.0
    %1051 = vmatprep.subr.mxu0 0.0
    %1052 = vmatpush1.msra.mxu0 0.0
    %1053 = vmatprep.subr.mxu0 0.0
    %1054 = vmatpush1.msra.mxu0 0.0
    %1055 = vmatprep.subr.mxu0 0.0
    %1056 = vmatpush1.msra.mxu0 0.0
    %1057 = vmatprep.subr.mxu0 0.0
    %1058 = vmatpush1.msra.mxu0 0.0
    %1059 = vmatprep.subr.mxu0 0.0
    %1060 = vmatpush1.msra.mxu0 0.0
    %1061 = vmatprep.subr.mxu0 0.0
    %1062 = vmatpush1.msra.mxu0 0.0
    %1063 = vmatprep.subr.mxu0 0.0
    %1064 = vmatpush1.msra.mxu0 0.0
    %1065 = vmatprep.subr.mxu0 0.0
    %1066 = vmatpush1.msra.mxu0 0.0
    %1067 = vmatprep.subr.mxu0 0.0
    %1068 = vmatpush1.msra.mxu0 0.0
    %1069 = vmatprep.subr.mxu0 0.0
    %1070 = vmatpush1.msra.mxu0 0.0
    %1071 = vmatprep.subr.mxu0 0.0
    %1072 = vmatpush1.msra.mxu0 0.0
    %1073 = vmatprep.subr.mxu0 0.0
    %1074 = vmatpush1.msra.mxu0 0.0
    %1075 = vmatprep.subr.mxu0 0.0
    %1076 = vmatpush1.msra.mxu0 0.0
    %1077 = vmatprep.subr.mxu0 0.0
    %1078 = vmatpush1.msra.mxu0 0.0
    %1079 = vmatprep.subr.mxu0 0.0
    %1080 = vmatpush1.msra.mxu0 0.0
    %1081 = vmatprep.subr.mxu0 0.0
    %1082 = vmatpush1.msra.mxu0 0.0
    %1083 = vmatprep.subr.mxu0 0.0
    %1084 = vmatpush1.msra.mxu0 0.0
    %1085 = vmatprep.subr.mxu0 0.0
    %1086 = vmatpush1.msra.mxu0 0.0
    %1087 = vmatprep.subr.mxu0 0.0
    %1088 = vmatpush1.msra.mxu0 0.0
    %1089 = vmatprep.mubr.f32.mxu0 0.0
    %1090 = vmatmul.mubr.f32.gmra.mrb[0].mxu0 %v139
    %v1091 = vpop.f32.mrb[0].mxu0
    %v1092 = vadd.f32 0.0, %v1091
    %v1093 = vpop.f32.mrb[0].mxu0
    %1094 = vdwg.mxu0
    %v1095 = vlaneseq
    %v1096 = vshrl.u32 %v1095, 7
    %v1097 = vsub.s32 0, %v1096
    %v1098 = vrot.slane %v1019, %v1097
    %v1100 = vsel %vm294, %v1092, 0
    %1102 = vmatprep.subr.mxu0 0.0
    %1103 = vmatpush1.msra.mxu0 %v1018
    %1104 = vmatprep.subr.mxu0 0.0
    %1105 = vmatpush1.msra.mxu0 0.0
    %1106 = vmatprep.subr.mxu0 0.0
    %1107 = vmatpush1.msra.mxu0 0.0
    %1108 = vmatprep.subr.mxu0 0.0
    %1109 = vmatpush1.msra.mxu0 0.0
    %1110 = vmatprep.subr.mxu0 0.0
    %1111 = vmatpush1.msra.mxu0 0.0
    %1112 = vmatprep.subr.mxu0 0.0
    %1113 = vmatpush1.msra.mxu0 0.0
    %1114 = vmatprep.subr.mxu0 0.0
    %1115 = vmatpush1.msra.mxu0 0.0
    %1116 = vmatprep.subr.mxu0 0.0
    %1117 = vmatpush1.msra.mxu0 0.0
    %1118 = vmatprep.subr.mxu0 0.0
    %1119 = vmatpush1.msra.mxu0 0.0
    %1120 = vmatprep.subr.mxu0 0.0
    %1121 = vmatpush1.msra.mxu0 0.0
    %1122 = vmatprep.subr.mxu0 0.0
    %1123 = vmatpush1.msra.mxu0 0.0
    %1124 = vmatprep.subr.mxu0 0.0
    %1125 = vmatpush1.msra.mxu0 0.0
    %1126 = vmatprep.subr.mxu0 0.0
    %1127 = vmatpush1.msra.mxu0 0.0
    %1128 = vmatprep.subr.mxu0 0.0
    %1129 = vmatpush1.msra.mxu0 0.0
    %1130 = vmatprep.subr.mxu0 0.0
    %1131 = vmatpush1.msra.mxu0 0.0
    %1132 = vmatprep.subr.mxu0 0.0
    %1133 = vmatpush1.msra.mxu0 0.0
    %1134 = vmatprep.subr.mxu0 0.0
    %1135 = vmatpush1.msra.mxu0 0.0
    %1136 = vmatprep.subr.mxu0 0.0
    %1137 = vmatpush1.msra.mxu0 0.0
    %1138 = vmatprep.subr.mxu0 0.0
    %1139 = vmatpush1.msra.mxu0 0.0
    %1140 = vmatprep.subr.mxu0 0.0
    %1141 = vmatpush1.msra.mxu0 0.0
    %1142 = vmatprep.subr.mxu0 0.0
    %1143 = vmatpush1.msra.mxu0 0.0
    %1144 = vmatprep.subr.mxu0 0.0
    %1145 = vmatpush1.msra.mxu0 0.0
    %1146 = vmatprep.subr.mxu0 0.0
    %1147 = vmatpush1.msra.mxu0 0.0
    %1148 = vmatprep.subr.mxu0 0.0
    %1149 = vmatpush1.msra.mxu0 0.0
    %1150 = vmatprep.subr.mxu0 0.0
    %1151 = vmatpush1.msra.mxu0 0.0
    %1152 = vmatprep.subr.mxu0 0.0
    %1153 = vmatpush1.msra.mxu0 0.0
    %1154 = vmatprep.subr.mxu0 0.0
    %1155 = vmatpush1.msra.mxu0 0.0
    %1156 = vmatprep.subr.mxu0 0.0
    %1157 = vmatpush1.msra.mxu0 0.0
    %1158 = vmatprep.subr.mxu0 0.0
    %1159 = vmatpush1.msra.mxu0 0.0
    %1160 = vmatprep.subr.mxu0 0.0
    %1161 = vmatpush1.msra.mxu0 0.0
    %1162 = vmatprep.subr.mxu0 0.0
    %1163 = vmatpush1.msra.mxu0 0.0
    %1164 = vmatprep.subr.mxu0 0.0
    %1165 = vmatpush1.msra.mxu0 0.0
    %1166 = vmatprep.mubr.f32.mxu0 0.0
    %1167 = vmatmul.mubr.f32.gmra.mrb[0].mxu0 %v1100
    %v1168 = vpop.f32.mrb[0].mxu0
    %v1169 = vadd.f32 %v1098, %v1168
    %v1170 = vpop.f32.mrb[0].mxu0
    %1171 = vdwg.mxu0
    %v1172 = vmax.f32 %v1169, 0.0
    %1173 = vmatprep.subr.mxu0 0.0
    %1174 = vmatpush1.msra.mxu0 %v1172
    %1175 = vmatprep.subr.mxu0 0.0
    %1176 = vmatpush1.msra.mxu0 0.0
    %1177 = vmatprep.subr.mxu0 0.0
    %1178 = vmatpush1.msra.mxu0 0.0
    %1179 = vmatprep.subr.mxu0 0.0
    %1180 = vmatpush1.msra.mxu0 0.0
    %1181 = vmatprep.subr.mxu0 0.0
    %1182 = vmatpush1.msra.mxu0 0.0
    %1183 = vmatprep.subr.mxu0 0.0
    %1184 = vmatpush1.msra.mxu0 0.0
    %1185 = vmatprep.subr.mxu0 0.0
    %1186 = vmatpush1.msra.mxu0 0.0
    %1187 = vmatprep.subr.mxu0 0.0
    %1188 = vmatpush1.msra.mxu0 0.0
    %1189 = vmatprep.subr.mxu0 0.0
    %1190 = vmatpush1.msra.mxu0 0.0
    %1191 = vmatprep.subr.mxu0 0.0
    %1192 = vmatpush1.msra.mxu0 0.0
    %1193 = vmatprep.subr.mxu0 0.0
    %1194 = vmatpush1.msra.mxu0 0.0
    %1195 = vmatprep.subr.mxu0 0.0
    %1196 = vmatpush1.msra.mxu0 0.0
    %1197 = vmatprep.subr.mxu0 0.0
    %1198 = vmatpush1.msra.mxu0 0.0
    %1199 = vmatprep.subr.mxu0 0.0
    %1200 = vmatpush1.msra.mxu0 0.0
    %1201 = vmatprep.subr.mxu0 0.0
    %1202 = vmatpush1.msra.mxu0 0.0
    %1203 = vmatprep.subr.mxu0 0.0
    %1204 = vmatpush1.msra.mxu0 0.0
    %1205 = vmatprep.subr.mxu0 0.0
    %1206 = vmatpush1.msra.mxu0 0.0
    %1207 = vmatprep.subr.mxu0 0.0
    %1208 = vmatpush1.msra.mxu0 0.0
    %1209 = vmatprep.subr.mxu0 0.0
    %1210 = vmatpush1.msra.mxu0 0.0
    %1211 = vmatprep.subr.mxu0 0.0
    %1212 = vmatpush1.msra.mxu0 0.0
    %1213 = vmatprep.subr.mxu0 0.0
    %1214 = vmatpush1.msra.mxu0 0.0
    %1215 = vmatprep.subr.mxu0 0.0
    %1216 = vmatpush1.msra.mxu0 0.0
    %1217 = vmatprep.subr.mxu0 0.0
    %1218 = vmatpush1.msra.mxu0 0.0
    %1219 = vmatprep.subr.mxu0 0.0
    %1220 = vmatpush1.msra.mxu0 0.0
    %1221 = vmatprep.subr.mxu0 0.0
    %1222 = vmatpush1.msra.mxu0 0.0
    %1223 = vmatprep.subr.mxu0 0.0
    %1224 = vmatpush1.msra.mxu0 0.0
    %1225 = vmatprep.subr.mxu0 0.0
    %1226 = vmatpush1.msra.mxu0 0.0
    %1227 = vmatprep.subr.mxu0 0.0
    %1228 = vmatpush1.msra.mxu0 0.0
    %1229 = vmatprep.subr.mxu0 0.0
    %1230 = vmatpush1.msra.mxu0 0.0
    %1231 = vmatprep.subr.mxu0 0.0
    %1232 = vmatpush1.msra.mxu0 0.0
    %1233 = vmatprep.subr.mxu0 0.0
    %1234 = vmatpush1.msra.mxu0 0.0
    %1235 = vmatprep.subr.mxu0 0.0
    %1236 = vmatpush1.msra.mxu0 0.0
    %1237 = vmatprep.mubr.f32.mxu0 0.0
    %1238 = vmatmul.mubr.f32.gmra.mrb[0].mxu0 %v296
    %v1239 = vpop.f32.mrb[0].mxu0
    %v1240 = vadd.f32 0.0, %v1239
    %v1241 = vpop.f32.mrb[0].mxu0
    %1242 = vmatprep.mubr.f32.mxu0 0.0
    %1243 = vmatmul.mubr.f32.gmra.mrb[0].mxu0 %v299
    %v1244 = vpop.f32.mrb[0].mxu0
    %v1245 = vadd.f32 0.0, %v1244
    %v1246 = vpop.f32.mrb[0].mxu0
    %1247 = vmatprep.mubr.f32.mxu0 0.0
    %1248 = vmatmul.mubr.f32.gmra.mrb[0].mxu0 %v302
    %v1249 = vpop.f32.mrb[0].mxu0
    %v1250 = vadd.f32 0.0, %v1249
    %v1251 = vpop.f32.mrb[0].mxu0
    %1252 = vdwg.mxu0
    %v1253 = vlaneseq
    %v1254 = vshrl.u32 %v1253, 7
    %v1255 = vsub.s32 0, %v1254
    %v1256 = vrot.slane %v1021, %v1255
    %v1258 = vsel %vm294, %v1005, 0
    %v1261 = vsel %vm294, %v1010, 0
    %v1263 = vsel %vm294, %v1015, 0
    %1265 = vmatprep.subr.mxu0 0.0
    %1266 = vmatpush1.msra.mxu0 %v1020
    %1267 = vmatprep.subr.mxu0 0.0
    %1268 = vmatpush1.msra.mxu0 0.0
    %1269 = vmatprep.subr.mxu0 0.0
    %1270 = vmatpush1.msra.mxu0 0.0
    %1271 = vmatprep.subr.mxu0 0.0
    %1272 = vmatpush1.msra.mxu0 0.0
    %1273 = vmatprep.subr.mxu0 0.0
    %1274 = vmatpush1.msra.mxu0 0.0
    %1275 = vmatprep.subr.mxu0 0.0
    %1276 = vmatpush1.msra.mxu0 0.0
    %1277 = vmatprep.subr.mxu0 0.0
    %1278 = vmatpush1.msra.mxu0 0.0
    %1279 = vmatprep.subr.mxu0 0.0
    %1280 = vmatpush1.msra.mxu0 0.0
    %1281 = vmatprep.subr.mxu0 0.0
    %1282 = vmatpush1.msra.mxu0 0.0
    %1283 = vmatprep.subr.mxu0 0.0
    %1284 = vmatpush1.msra.mxu0 0.0
    %1285 = vmatprep.subr.mxu0 0.0
    %1286 = vmatpush1.msra.mxu0 0.0
    %1287 = vmatprep.subr.mxu0 0.0
    %1288 = vmatpush1.msra.mxu0 0.0
    %1289 = vmatprep.subr.mxu0 0.0
    %1290 = vmatpush1.msra.mxu0 0.0
    %1291 = vmatprep.subr.mxu0 0.0
    %1292 = vmatpush1.msra.mxu0 0.0
    %1293 = vmatprep.subr.mxu0 0.0
    %1294 = vmatpush1.msra.mxu0 0.0
    %1295 = vmatprep.subr.mxu0 0.0
    %1296 = vmatpush1.msra.mxu0 0.0
    %1297 = vmatprep.subr.mxu0 0.0
    %1298 = vmatpush1.msra.mxu0 0.0
    %1299 = vmatprep.subr.mxu0 0.0
    %1300 = vmatpush1.msra.mxu0 0.0
    %1301 = vmatprep.subr.mxu0 0.0
    %1302 = vmatpush1.msra.mxu0 0.0
    %1303 = vmatprep.subr.mxu0 0.0
    %1304 = vmatpush1.msra.mxu0 0.0
    %1305 = vmatprep.subr.mxu0 0.0
    %1306 = vmatpush1.msra.mxu0 0.0
    %1307 = vmatprep.subr.mxu0 0.0
    %1308 = vmatpush1.msra.mxu0 0.0
    %1309 = vmatprep.subr.mxu0 0.0
    %1310 = vmatpush1.msra.mxu0 0.0
    %1311 = vmatprep.subr.mxu0 0.0
    %1312 = vmatpush1.msra.mxu0 0.0
    %1313 = vmatprep.subr.mxu0 0.0
    %1314 = vmatpush1.msra.mxu0 0.0
    %1315 = vmatprep.subr.mxu0 0.0
    %1316 = vmatpush1.msra.mxu0 0.0
    %1317 = vmatprep.subr.mxu0 0.0
    %1318 = vmatpush1.msra.mxu0 0.0
    %1319 = vmatprep.subr.mxu0 0.0
    %1320 = vmatpush1.msra.mxu0 0.0
    %1321 = vmatprep.subr.mxu0 0.0
    %1322 = vmatpush1.msra.mxu0 0.0
    %1323 = vmatprep.subr.mxu0 0.0
    %1324 = vmatpush1.msra.mxu0 0.0
    %1325 = vmatprep.subr.mxu0 0.0
    %1326 = vmatpush1.msra.mxu0 0.0
    %1327 = vmatprep.subr.mxu0 0.0
    %1328 = vmatpush1.msra.mxu0 0.0
    %1329 = vmatprep.mubr.f32.mxu0 0.0
    %1330 = vmatmul.mubr.f32.gmra.mrb[0].mxu0 %v1258
    %v1331 = vpop.f32.mrb[0].mxu0
    %v1332 = vadd.f32 %v1256, %v1331
    %v1333 = vpop.f32.mrb[0].mxu0
    %1334 = vmatprep.mubr.f32.mxu0 0.0
    %1335 = vmatmul.mubr.f32.gmra.mrb[0].mxu0 %v1261
    %v1336 = vpop.f32.mrb[0].mxu0
    %v1337 = vadd.f32 %v1256, %v1336
    %v1338 = vpop.f32.mrb[0].mxu0
    %1339 = vmatprep.mubr.f32.mxu0 0.0
    %1340 = vmatmul.mubr.f32.gmra.mrb[0].mxu0 %v1263
    %v1341 = vpop.f32.mrb[0].mxu0
    %v1342 = vadd.f32 %v1256, %v1341
    %v1343 = vpop.f32.mrb[0].mxu0
    %1344 = vdwg.mxu0
    %v1345 = vadd.f32 %v1332, %v1240
    %v1346 = vadd.f32 %v1337, %v1245
    %v1347 = vadd.f32 %v1342, %v1250
    %v1348 = vmax.f32 %v1345, 0.0
    %v1349 = vmax.f32 %v1346, 0.0
    %v1350 = vmax.f32 %v1347, 0.0
    %v1351 = vld [vmem:[#allocation5 + $0x80] sm:$0xff]
    %v1352 = vld [vmem:[#allocation5 + $0x88] sm:$0xff]
    %v1353 = vld [vmem:[#allocation5 + $0x90] sm:$0xff]
    %v1354 = vld [vmem:[#allocation5 + $0x98] sm:$0xff]
    %v1355 = vld [vmem:[%s4 + $0xa] sm:$0x1]
    %v1356 = vld [vmem:[#allocation5 + $0xa0] sm:$0xff]
    %v1357 = vld [vmem:[#allocation5 + $0xa8] sm:$0xff]
    %v1358 = vld [vmem:[#allocation5 + $0xb0] sm:$0xff]
    %v1359 = vld [vmem:[#allocation5 + $0xb8] sm:$0xff]
    %v1360 = vld [vmem:[%s4 + $0xb] sm:$0x1]
    %v1362 = vsel %vm141, %v1350, 0
    %1364 = vmatprep.subr.mxu0 0.0
    %1365 = vmatpush1.msra.mxu0 %v1348
    %1366 = vmatprep.subr.mxu0 0.0
    %1367 = vmatpush1.msra.mxu0 %v1349
    %1368 = vmatprep.subr.mxu0 0.0
    %1369 = vmatpush1.msra.mxu0 %v1362
    %1370 = vmatprep.subr.mxu0 0.0
    %1371 = vmatpush1.msra.mxu0 0.0
    %1372 = vmatprep.subr.mxu0 0.0
    %1373 = vmatpush1.msra.mxu0 0.0
    %1374 = vmatprep.subr.mxu0 0.0
    %1375 = vmatpush1.msra.mxu0 0.0
    %1376 = vmatprep.subr.mxu0 0.0
    %1377 = vmatpush1.msra.mxu0 0.0
    %1378 = vmatprep.subr.mxu0 0.0
    %1379 = vmatpush1.msra.mxu0 0.0
    %1380 = vmatprep.subr.mxu0 0.0
    %1381 = vmatpush1.msra.mxu0 0.0
    %1382 = vmatprep.subr.mxu0 0.0
    %1383 = vmatpush1.msra.mxu0 0.0
    %1384 = vmatprep.subr.mxu0 0.0
    %1385 = vmatpush1.msra.mxu0 0.0
    %1386 = vmatprep.subr.mxu0 0.0
    %1387 = vmatpush1.msra.mxu0 0.0
    %1388 = vmatprep.subr.mxu0 0.0
    %1389 = vmatpush1.msra.mxu0 0.0
    %1390 = vmatprep.subr.mxu0 0.0
    %1391 = vmatpush1.msra.mxu0 0.0
    %1392 = vmatprep.subr.mxu0 0.0
    %1393 = vmatpush1.msra.mxu0 0.0
    %1394 = vmatprep.subr.mxu0 0.0
    %1395 = vmatpush1.msra.mxu0 0.0
    %1396 = vmatprep.subr.mxu0 0.0
    %1397 = vmatpush1.msra.mxu0 0.0
    %1398 = vmatprep.subr.mxu0 0.0
    %1399 = vmatpush1.msra.mxu0 0.0
    %1400 = vmatprep.subr.mxu0 0.0
    %1401 = vmatpush1.msra.mxu0 0.0
    %1402 = vmatprep.subr.mxu0 0.0
    %1403 = vmatpush1.msra.mxu0 0.0
    %1404 = vmatprep.subr.mxu0 0.0
    %1405 = vmatpush1.msra.mxu0 0.0
    %1406 = vmatprep.subr.mxu0 0.0
    %1407 = vmatpush1.msra.mxu0 0.0
    %1408 = vmatprep.subr.mxu0 0.0
    %1409 = vmatpush1.msra.mxu0 0.0
    %1410 = vmatprep.subr.mxu0 0.0
    %1411 = vmatpush1.msra.mxu0 0.0
    %1412 = vmatprep.subr.mxu0 0.0
    %1413 = vmatpush1.msra.mxu0 0.0
    %1414 = vmatprep.subr.mxu0 0.0
    %1415 = vmatpush1.msra.mxu0 0.0
    %1416 = vmatprep.subr.mxu0 0.0
    %1417 = vmatpush1.msra.mxu0 0.0
    %1418 = vmatprep.subr.mxu0 0.0
    %1419 = vmatpush1.msra.mxu0 0.0
    %1420 = vmatprep.subr.mxu0 0.0
    %1421 = vmatpush1.msra.mxu0 0.0
    %1422 = vmatprep.subr.mxu0 0.0
    %1423 = vmatpush1.msra.mxu0 0.0
    %1424 = vmatprep.subr.mxu0 0.0
    %1425 = vmatpush1.msra.mxu0 0.0
    %1426 = vmatprep.subr.mxu0 0.0
    %1427 = vmatpush1.msra.mxu0 0.0
    %1428 = vmatprep.mubr.f32.mxu0 0.0
    %1429 = vmatmul.mubr.f32.gmra.mrb[0].mxu0 %v139
    %v1430 = vpop.f32.mrb[0].mxu0
    %v1431 = vadd.f32 0.0, %v1430
    %v1432 = vpop.f32.mrb[0].mxu0
    %1433 = vdwg.mxu0
    %v1434 = vlaneseq
    %v1435 = vshrl.u32 %v1434, 7
    %v1436 = vsub.s32 0, %v1435
    %v1437 = vrot.slane %v1355, %v1436
    %v1439 = vsel %vm569, %v1431, 0
    %1441 = vmatprep.subr.mxu0 0.0
    %1442 = vmatpush1.msra.mxu0 %v1351
    %1443 = vmatprep.subr.mxu0 0.0
    %1444 = vmatpush1.msra.mxu0 %v1352
    %1445 = vmatprep.subr.mxu0 0.0
    %1446 = vmatpush1.msra.mxu0 %v1353
    %1447 = vmatprep.subr.mxu0 0.0
    %1448 = vmatpush1.msra.mxu0 %v1354
    %1449 = vmatprep.subr.mxu0 0.0
    %1450 = vmatpush1.msra.mxu0 0.0
    %1451 = vmatprep.subr.mxu0 0.0
    %1452 = vmatpush1.msra.mxu0 0.0
    %1453 = vmatprep.subr.mxu0 0.0
    %1454 = vmatpush1.msra.mxu0 0.0
    %1455 = vmatprep.subr.mxu0 0.0
    %1456 = vmatpush1.msra.mxu0 0.0
    %1457 = vmatprep.subr.mxu0 0.0
    %1458 = vmatpush1.msra.mxu0 0.0
    %1459 = vmatprep.subr.mxu0 0.0
    %1460 = vmatpush1.msra.mxu0 0.0
    %1461 = vmatprep.subr.mxu0 0.0
    %1462 = vmatpush1.msra.mxu0 0.0
    %1463 = vmatprep.subr.mxu0 0.0
    %1464 = vmatpush1.msra.mxu0 0.0
    %1465 = vmatprep.subr.mxu0 0.0
    %1466 = vmatpush1.msra.mxu0 0.0
    %1467 = vmatprep.subr.mxu0 0.0
    %1468 = vmatpush1.msra.mxu0 0.0
    %1469 = vmatprep.subr.mxu0 0.0
    %1470 = vmatpush1.msra.mxu0 0.0
    %1471 = vmatprep.subr.mxu0 0.0
    %1472 = vmatpush1.msra.mxu0 0.0
    %1473 = vmatprep.subr.mxu0 0.0
    %1474 = vmatpush1.msra.mxu0 0.0
    %1475 = vmatprep.subr.mxu0 0.0
    %1476 = vmatpush1.msra.mxu0 0.0
    %1477 = vmatprep.subr.mxu0 0.0
    %1478 = vmatpush1.msra.mxu0 0.0
    %1479 = vmatprep.subr.mxu0 0.0
    %1480 = vmatpush1.msra.mxu0 0.0
    %1481 = vmatprep.subr.mxu0 0.0
    %1482 = vmatpush1.msra.mxu0 0.0
    %1483 = vmatprep.subr.mxu0 0.0
    %1484 = vmatpush1.msra.mxu0 0.0
    %1485 = vmatprep.subr.mxu0 0.0
    %1486 = vmatpush1.msra.mxu0 0.0
    %1487 = vmatprep.subr.mxu0 0.0
    %1488 = vmatpush1.msra.mxu0 0.0
    %1489 = vmatprep.subr.mxu0 0.0
    %1490 = vmatpush1.msra.mxu0 0.0
    %1491 = vmatprep.subr.mxu0 0.0
    %1492 = vmatpush1.msra.mxu0 0.0
    %1493 = vmatprep.subr.mxu0 0.0
    %1494 = vmatpush1.msra.mxu0 0.0
    %1495 = vmatprep.subr.mxu0 0.0
    %1496 = vmatpush1.msra.mxu0 0.0
    %1497 = vmatprep.subr.mxu0 0.0
    %1498 = vmatpush1.msra.mxu0 0.0
    %1499 = vmatprep.subr.mxu0 0.0
    %1500 = vmatpush1.msra.mxu0 0.0
    %1501 = vmatprep.subr.mxu0 0.0
    %1502 = vmatpush1.msra.mxu0 0.0
    %1503 = vmatprep.subr.mxu0 0.0
    %1504 = vmatpush1.msra.mxu0 0.0
    %1505 = vmatprep.mubr.f32.mxu0 0.0
    %1506 = vmatmul.mubr.f32.gmra.mrb[0].mxu0 %v1439
    %v1507 = vpop.f32.mrb[0].mxu0
    %v1508 = vadd.f32 %v1437, %v1507
    %v1509 = vpop.f32.mrb[0].mxu0
    %1510 = vdwg.mxu0
    %v1511 = vmax.f32 %v1508, 0.0
    %1512 = vmatprep.subr.mxu0 0.0
    %1513 = vmatpush1.msra.mxu0 %v1511
    %1514 = vmatprep.subr.mxu0 0.0
    %1515 = vmatpush1.msra.mxu0 0.0
    %1516 = vmatprep.subr.mxu0 0.0
    %1517 = vmatpush1.msra.mxu0 0.0
    %1518 = vmatprep.subr.mxu0 0.0
    %1519 = vmatpush1.msra.mxu0 0.0
    %1520 = vmatprep.subr.mxu0 0.0
    %1521 = vmatpush1.msra.mxu0 0.0
    %1522 = vmatprep.subr.mxu0 0.0
    %1523 = vmatpush1.msra.mxu0 0.0
    %1524 = vmatprep.subr.mxu0 0.0
    %1525 = vmatpush1.msra.mxu0 0.0
    %1526 = vmatprep.subr.mxu0 0.0
    %1527 = vmatpush1.msra.mxu0 0.0
    %1528 = vmatprep.subr.mxu0 0.0
    %1529 = vmatpush1.msra.mxu0 0.0
    %1530 = vmatprep.subr.mxu0 0.0
    %1531 = vmatpush1.msra.mxu0 0.0
    %1532 = vmatprep.subr.mxu0 0.0
    %1533 = vmatpush1.msra.mxu0 0.0
    %1534 = vmatprep.subr.mxu0 0.0
    %1535 = vmatpush1.msra.mxu0 0.0
    %1536 = vmatprep.subr.mxu0 0.0
    %1537 = vmatpush1.msra.mxu0 0.0
    %1538 = vmatprep.subr.mxu0 0.0
    %1539 = vmatpush1.msra.mxu0 0.0
    %1540 = vmatprep.subr.mxu0 0.0
    %1541 = vmatpush1.msra.mxu0 0.0
    %1542 = vmatprep.subr.mxu0 0.0
    %1543 = vmatpush1.msra.mxu0 0.0
    %1544 = vmatprep.subr.mxu0 0.0
    %1545 = vmatpush1.msra.mxu0 0.0
    %1546 = vmatprep.subr.mxu0 0.0
    %1547 = vmatpush1.msra.mxu0 0.0
    %1548 = vmatprep.subr.mxu0 0.0
    %1549 = vmatpush1.msra.mxu0 0.0
    %1550 = vmatprep.subr.mxu0 0.0
    %1551 = vmatpush1.msra.mxu0 0.0
    %1552 = vmatprep.subr.mxu0 0.0
    %1553 = vmatpush1.msra.mxu0 0.0
    %1554 = vmatprep.subr.mxu0 0.0
    %1555 = vmatpush1.msra.mxu0 0.0
    %1556 = vmatprep.subr.mxu0 0.0
    %1557 = vmatpush1.msra.mxu0 0.0
    %1558 = vmatprep.subr.mxu0 0.0
    %1559 = vmatpush1.msra.mxu0 0.0
    %1560 = vmatprep.subr.mxu0 0.0
    %1561 = vmatpush1.msra.mxu0 0.0
    %1562 = vmatprep.subr.mxu0 0.0
    %1563 = vmatpush1.msra.mxu0 0.0
    %1564 = vmatprep.subr.mxu0 0.0
    %1565 = vmatpush1.msra.mxu0 0.0
    %1566 = vmatprep.subr.mxu0 0.0
    %1567 = vmatpush1.msra.mxu0 0.0
    %1568 = vmatprep.subr.mxu0 0.0
    %1569 = vmatpush1.msra.mxu0 0.0
    %1570 = vmatprep.subr.mxu0 0.0
    %1571 = vmatpush1.msra.mxu0 0.0
    %1572 = vmatprep.subr.mxu0 0.0
    %1573 = vmatpush1.msra.mxu0 0.0
    %1574 = vmatprep.subr.mxu0 0.0
    %1575 = vmatpush1.msra.mxu0 0.0
    %1576 = vmatprep.mubr.f32.mxu0 0.0
    %1577 = vmatmul.mubr.f32.gmra.mrb[0].mxu0 %v296
    %v1578 = vpop.f32.mrb[0].mxu0
    %v1579 = vadd.f32 0.0, %v1578
    %v1580 = vpop.f32.mrb[0].mxu0
    %1581 = vmatprep.mubr.f32.mxu0 0.0
    %1582 = vmatmul.mubr.f32.gmra.mrb[0].mxu0 %v299
    %v1583 = vpop.f32.mrb[0].mxu0
    %v1584 = vadd.f32 0.0, %v1583
    %v1585 = vpop.f32.mrb[0].mxu0
    %1586 = vmatprep.mubr.f32.mxu0 0.0
    %1587 = vmatmul.mubr.f32.gmra.mrb[0].mxu0 %v302
    %v1588 = vpop.f32.mrb[0].mxu0
    %v1589 = vadd.f32 0.0, %v1588
    %v1590 = vpop.f32.mrb[0].mxu0
    %1591 = vdwg.mxu0
    %v1592 = vlaneseq
    %v1593 = vshrl.u32 %v1592, 7
    %v1594 = vsub.s32 0, %v1593
    %v1595 = vrot.slane %v1360, %v1594
    %v1597 = vsel %vm569, %v1348, 0
    %v1600 = vsel %vm569, %v1349, 0
    %v1602 = vsel %vm569, %v1350, 0
    %1604 = vmatprep.subr.mxu0 0.0
    %1605 = vmatpush1.msra.mxu0 %v1356
    %1606 = vmatprep.subr.mxu0 0.0
    %1607 = vmatpush1.msra.mxu0 %v1357
    %1608 = vmatprep.subr.mxu0 0.0
    %1609 = vmatpush1.msra.mxu0 %v1358
    %1610 = vmatprep.subr.mxu0 0.0
    %1611 = vmatpush1.msra.mxu0 %v1359
    %1612 = vmatprep.subr.mxu0 0.0
    %1613 = vmatpush1.msra.mxu0 0.0
    %1614 = vmatprep.subr.mxu0 0.0
    %1615 = vmatpush1.msra.mxu0 0.0
    %1616 = vmatprep.subr.mxu0 0.0
    %1617 = vmatpush1.msra.mxu0 0.0
    %1618 = vmatprep.subr.mxu0 0.0
    %1619 = vmatpush1.msra.mxu0 0.0
    %1620 = vmatprep.subr.mxu0 0.0
    %1621 = vmatpush1.msra.mxu0 0.0
    %1622 = vmatprep.subr.mxu0 0.0
    %1623 = vmatpush1.msra.mxu0 0.0
    %1624 = vmatprep.subr.mxu0 0.0
    %1625 = vmatpush1.msra.mxu0 0.0
    %1626 = vmatprep.subr.mxu0 0.0
    %1627 = vmatpush1.msra.mxu0 0.0
    %1628 = vmatprep.subr.mxu0 0.0
    %1629 = vmatpush1.msra.mxu0 0.0
    %1630 = vmatprep.subr.mxu0 0.0
    %1631 = vmatpush1.msra.mxu0 0.0
    %1632 = vmatprep.subr.mxu0 0.0
    %1633 = vmatpush1.msra.mxu0 0.0
    %1634 = vmatprep.subr.mxu0 0.0
    %1635 = vmatpush1.msra.mxu0 0.0
    %1636 = vmatprep.subr.mxu0 0.0
    %1637 = vmatpush1.msra.mxu0 0.0
    %1638 = vmatprep.subr.mxu0 0.0
    %1639 = vmatpush1.msra.mxu0 0.0
    %1640 = vmatprep.subr.mxu0 0.0
    %1641 = vmatpush1.msra.mxu0 0.0
    %1642 = vmatprep.subr.mxu0 0.0
    %1643 = vmatpush1.msra.mxu0 0.0
    %1644 = vmatprep.subr.mxu0 0.0
    %1645 = vmatpush1.msra.mxu0 0.0
    %1646 = vmatprep.subr.mxu0 0.0
    %1647 = vmatpush1.msra.mxu0 0.0
    %1648 = vmatprep.subr.mxu0 0.0
    %1649 = vmatpush1.msra.mxu0 0.0
    %1650 = vmatprep.subr.mxu0 0.0
    %1651 = vmatpush1.msra.mxu0 0.0
    %1652 = vmatprep.subr.mxu0 0.0
    %1653 = vmatpush1.msra.mxu0 0.0
    %1654 = vmatprep.subr.mxu0 0.0
    %1655 = vmatpush1.msra.mxu0 0.0
    %1656 = vmatprep.subr.mxu0 0.0
    %1657 = vmatpush1.msra.mxu0 0.0
    %1658 = vmatprep.subr.mxu0 0.0
    %1659 = vmatpush1.msra.mxu0 0.0
    %1660 = vmatprep.subr.mxu0 0.0
    %1661 = vmatpush1.msra.mxu0 0.0
    %1662 = vmatprep.subr.mxu0 0.0
    %1663 = vmatpush1.msra.mxu0 0.0
    %1664 = vmatprep.subr.mxu0 0.0
    %1665 = vmatpush1.msra.mxu0 0.0
    %1666 = vmatprep.subr.mxu0 0.0
    %1667 = vmatpush1.msra.mxu0 0.0
    %1668 = vmatprep.mubr.f32.mxu0 0.0
    %1669 = vmatmul.mubr.f32.gmra.mrb[0].mxu0 %v1597
    %v1670 = vpop.f32.mrb[0].mxu0
    %v1671 = vadd.f32 %v1595, %v1670
    %v1672 = vpop.f32.mrb[0].mxu0
    %1673 = vmatprep.mubr.f32.mxu0 0.0
    %1674 = vmatmul.mubr.f32.gmra.mrb[0].mxu0 %v1600
    %v1675 = vpop.f32.mrb[0].mxu0
    %v1676 = vadd.f32 %v1595, %v1675
    %v1677 = vpop.f32.mrb[0].mxu0
    %1678 = vmatprep.mubr.f32.mxu0 0.0
    %1679 = vmatmul.mubr.f32.gmra.mrb[0].mxu0 %v1602
    %v1680 = vpop.f32.mrb[0].mxu0
    %v1681 = vadd.f32 %v1595, %v1680
    %v1682 = vpop.f32.mrb[0].mxu0
    %1683 = vdwg.mxu0
    %v1684 = vadd.f32 %v1671, %v1579
    %v1685 = vadd.f32 %v1676, %v1584
    %v1686 = vadd.f32 %v1681, %v1589
    %v1687 = vmax.f32 %v1684, 0.0
    %v1688 = vmax.f32 %v1685, 0.0
    %v1689 = vmax.f32 %v1686, 0.0
    %v1690 = vlaneseq
    %v1691 = vand.u32 %v1690, 127
    %vm1692 = vcmp.eq.s32.totalorder %v56, 0
    %vm1693 = vcmp.eq.s32.totalorder %v1691, %v60
    %vm1694 = vmand %vm1692, %vm1693
    %v1695 = vsel %vm1694, 1.0, 0.0
    %v1696 = vadd.f32 %v1695, 0.0
    %vm1697 = vcmp.eq.s32.totalorder %v56, 1
    %vm1698 = vcmp.eq.s32.totalorder %v1691, %v74
    %vm1699 = vmand %vm1697, %vm1698
    %v1700 = vsel %vm1699, 1.0, 0.0
    %v1701 = vadd.f32 %v1696, %v1700
    %vm1702 = vcmp.eq.s32.totalorder %v56, 2
    %vm1703 = vcmp.eq.s32.totalorder %v1691, %v88
    %vm1704 = vmand %vm1702, %vm1703
    %v1705 = vsel %vm1704, 1.0, 0.0
    %v1706 = vadd.f32 %v1701, %v1705
    %vm1707 = vcmp.eq.s32.totalorder %v56, 3
    %vm1708 = vcmp.eq.s32.totalorder %v1691, %v102
    %vm1709 = vmand %vm1707, %vm1708
    %v1710 = vsel %vm1709, 1.0, 0.0
    %v1711 = vadd.f32 %v1706, %v1710
    %v1713 = vsel %vm137, %v1711, 0
    %v1716 = vsel %vm141, %v1689, 0
    %1718 = vmatprep.subr.mxu0 0.0
    %1719 = vmatpush1.msra.mxu0 %v1687
    %1720 = vmatprep.subr.mxu0 0.0
    %1721 = vmatpush1.msra.mxu0 %v1688
    %1722 = vmatprep.subr.mxu0 0.0
    %1723 = vmatpush1.msra.mxu0 %v1716
    %1724 = vmatprep.subr.mxu0 0.0
    %1725 = vmatpush1.msra.mxu0 0.0
    %1726 = vmatprep.subr.mxu0 0.0
    %1727 = vmatpush1.msra.mxu0 0.0
    %1728 = vmatprep.subr.mxu0 0.0
    %1729 = vmatpush1.msra.mxu0 0.0
    %1730 = vmatprep.subr.mxu0 0.0
    %1731 = vmatpush1.msra.mxu0 0.0
    %1732 = vmatprep.subr.mxu0 0.0
    %1733 = vmatpush1.msra.mxu0 0.0
    %1734 = vmatprep.subr.mxu0 0.0
    %1735 = vmatpush1.msra.mxu0 0.0
    %1736 = vmatprep.subr.mxu0 0.0
    %1737 = vmatpush1.msra.mxu0 0.0
    %1738 = vmatprep.subr.mxu0 0.0
    %1739 = vmatpush1.msra.mxu0 0.0
    %1740 = vmatprep.subr.mxu0 0.0
    %1741 = vmatpush1.msra.mxu0 0.0
    %1742 = vmatprep.subr.mxu0 0.0
    %1743 = vmatpush1.msra.mxu0 0.0
    %1744 = vmatprep.subr.mxu0 0.0
    %1745 = vmatpush1.msra.mxu0 0.0
    %1746 = vmatprep.subr.mxu0 0.0
    %1747 = vmatpush1.msra.mxu0 0.0
    %1748 = vmatprep.subr.mxu0 0.0
    %1749 = vmatpush1.msra.mxu0 0.0
    %1750 = vmatprep.subr.mxu0 0.0
    %1751 = vmatpush1.msra.mxu0 0.0
    %1752 = vmatprep.subr.mxu0 0.0
    %1753 = vmatpush1.msra.mxu0 0.0
    %1754 = vmatprep.subr.mxu0 0.0
    %1755 = vmatpush1.msra.mxu0 0.0
    %1756 = vmatprep.subr.mxu0 0.0
    %1757 = vmatpush1.msra.mxu0 0.0
    %1758 = vmatprep.subr.mxu0 0.0
    %1759 = vmatpush1.msra.mxu0 0.0
    %1760 = vmatprep.subr.mxu0 0.0
    %1761 = vmatpush1.msra.mxu0 0.0
    %1762 = vmatprep.subr.mxu0 0.0
    %1763 = vmatpush1.msra.mxu0 0.0
    %1764 = vmatprep.subr.mxu0 0.0
    %1765 = vmatpush1.msra.mxu0 0.0
    %1766 = vmatprep.subr.mxu0 0.0
    %1767 = vmatpush1.msra.mxu0 0.0
    %1768 = vmatprep.subr.mxu0 0.0
    %1769 = vmatpush1.msra.mxu0 0.0
    %1770 = vmatprep.subr.mxu0 0.0
    %1771 = vmatpush1.msra.mxu0 0.0
    %1772 = vmatprep.subr.mxu0 0.0
    %1773 = vmatpush1.msra.mxu0 0.0
    %1774 = vmatprep.subr.mxu0 0.0
    %1775 = vmatpush1.msra.mxu0 0.0
    %1776 = vmatprep.subr.mxu0 0.0
    %1777 = vmatpush1.msra.mxu0 0.0
    %1778 = vmatprep.subr.mxu0 0.0
    %1779 = vmatpush1.msra.mxu0 0.0
    %1780 = vmatprep.subr.mxu0 0.0
    %1781 = vmatpush1.msra.mxu0 0.0
    %1782 = vmatprep.mubr.f32.mxu0 0.0
    %1783 = vmatmul.mubr.f32.gmra.mrb[0].mxu0 %v1713
    %v1784 = vpop.f32.mrb[0].mxu0
    %v1785 = vadd.f32 0.0, %v1784
    %v1786 = vpop.f32.mrb[0].mxu0
    %1787 = vdwg.mxu0
    %v1789 = vsel %vm141, %v53, 0
    %1791 = vmatprep.subr.mxu0 0.0
    %1792 = vmatpush1.msra.mxu0 %v51
    %1793 = vmatprep.subr.mxu0 0.0
    %1794 = vmatpush1.msra.mxu0 %v52
    %1795 = vmatprep.subr.mxu0 0.0
    %1796 = vmatpush1.msra.mxu0 %v1789
    %1797 = vmatprep.subr.mxu0 0.0
    %1798 = vmatpush1.msra.mxu0 0.0
    %1799 = vmatprep.subr.mxu0 0.0
    %1800 = vmatpush1.msra.mxu0 0.0
    %1801 = vmatprep.subr.mxu0 0.0
    %1802 = vmatpush1.msra.mxu0 0.0
    %1803 = vmatprep.subr.mxu0 0.0
    %1804 = vmatpush1.msra.mxu0 0.0
    %1805 = vmatprep.subr.mxu0 0.0
    %1806 = vmatpush1.msra.mxu0 0.0
    %1807 = vmatprep.subr.mxu0 0.0
    %1808 = vmatpush1.msra.mxu0 0.0
    %1809 = vmatprep.subr.mxu0 0.0
    %1810 = vmatpush1.msra.mxu0 0.0
    %1811 = vmatprep.subr.mxu0 0.0
    %1812 = vmatpush1.msra.mxu0 0.0
    %1813 = vmatprep.subr.mxu0 0.0
    %1814 = vmatpush1.msra.mxu0 0.0
    %1815 = vmatprep.subr.mxu0 0.0
    %1816 = vmatpush1.msra.mxu0 0.0
    %1817 = vmatprep.subr.mxu0 0.0
    %1818 = vmatpush1.msra.mxu0 0.0
    %1819 = vmatprep.subr.mxu0 0.0
    %1820 = vmatpush1.msra.mxu0 0.0
    %1821 = vmatprep.subr.mxu0 0.0
    %1822 = vmatpush1.msra.mxu0 0.0
    %1823 = vmatprep.subr.mxu0 0.0
    %1824 = vmatpush1.msra.mxu0 0.0
    %1825 = vmatprep.subr.mxu0 0.0
    %1826 = vmatpush1.msra.mxu0 0.0
    %1827 = vmatprep.subr.mxu0 0.0
    %1828 = vmatpush1.msra.mxu0 0.0
    %1829 = vmatprep.subr.mxu0 0.0
    %1830 = vmatpush1.msra.mxu0 0.0
    %1831 = vmatprep.subr.mxu0 0.0
    %1832 = vmatpush1.msra.mxu0 0.0
    %1833 = vmatprep.subr.mxu0 0.0
    %1834 = vmatpush1.msra.mxu0 0.0
    %1835 = vmatprep.subr.mxu0 0.0
    %1836 = vmatpush1.msra.mxu0 0.0
    %1837 = vmatprep.subr.mxu0 0.0
    %1838 = vmatpush1.msra.mxu0 0.0
    %1839 = vmatprep.subr.mxu0 0.0
    %1840 = vmatpush1.msra.mxu0 0.0
    %1841 = vmatprep.subr.mxu0 0.0
    %1842 = vmatpush1.msra.mxu0 0.0
    %1843 = vmatprep.subr.mxu0 0.0
    %1844 = vmatpush1.msra.mxu0 0.0
    %1845 = vmatprep.subr.mxu0 0.0
    %1846 = vmatpush1.msra.mxu0 0.0
    %1847 = vmatprep.subr.mxu0 0.0
    %1848 = vmatpush1.msra.mxu0 0.0
    %1849 = vmatprep.subr.mxu0 0.0
    %1850 = vmatpush1.msra.mxu0 0.0
    %1851 = vmatprep.subr.mxu0 0.0
    %1852 = vmatpush1.msra.mxu0 0.0
    %1853 = vmatprep.subr.mxu0 0.0
    %1854 = vmatpush1.msra.mxu0 0.0
    %1855 = vmatprep.mubr.f32.mxu0 0.0
    %1856 = vmatmul.mubr.f32.gmra.mrb[0].mxu0 %v1713
    %v1857 = vpop.f32.mrb[0].mxu0
    %v1858 = vadd.f32 0.0, %v1857
    %v1859 = vpop.f32.mrb[0].mxu0
    %1860 = vdwg.mxu0
    %1861 = vst [vmem:[%s5] sm:$0xff] 0.0
    %1862 = vst [vmem:[%s5 + $0x8] sm:$0xff] 0.0
    %1863 = vst [vmem:[%s5 + $0x10] sm:$0xff] 0.0
    %1864 = vst [vmem:[%s5 + $0x18] sm:$0xff] 0.0
    %1865 = vst [vmem:[%s5 + $0x20] sm:$0xff] 0.0
    %1866 = vst [vmem:[%s5 + $0x28] sm:$0xff] 0.0
    %1867 = vst.msk [vmem:[%s5] sm:$0xff] %vm219, %v1687
    %1868 = vst.msk [vmem:[%s5 + $0x8] sm:$0xff] %vm219, %v1688
    %vm1869 = vcmask 125952
    %1870 = vst.msk [vmem:[%s5 + $0x10] sm:$0xf] %vm1869, %v1689
    %1871 = vst.msk [vmem:[%s5 + $0x18] sm:$0xff] %vm219, %v1785
    %1872 = vst.msk [vmem:[%s5 + $0x20] sm:$0xff] %vm219, %v1858
    %1873 = vst.msk [vmem:[%s5 + $0x28] sm:$0xff] %vm901, %v927
    // Predicated region
    $region30: #{forward.1} parent=1 // pred_check
      _
    $region31: #{forward.1} parent=1 // pred_check_branch
      %1875 = sbr.rel (0) target = $region33
    $region32: #{forward.1} parent=1 // pred_region
      _
    $region33: #{forward.1} parent=1 // pred_fallthru
      _
    // Predicated region
    $region34: #{forward.1} parent=1 // pred_check
      _
    $region35: #{forward.1} parent=1 // pred_check_branch
      %1877 = sbr.rel (0) target = $region37
    $region36: #{forward.1} parent=1 // pred_region
      _
    $region37: #{forward.1} parent=1 // pred_fallthru
      _
    %1878 = vsyncpa [#allocation3], 1
    %1879 = vsyncpa [#allocation4], 1

</llo_original>
